<compile_context>
chip_gen: v7x
topology: tpu7x:2x2x1
jax: 0.10.0
libtpu: 0.0.40
codegen_flags: <defaults>
</compile_context>

<pallas_src>
import functools

import jax
import jax.numpy as jnp
from jax import lax
from jax.experimental import pallas as pl
from jax.experimental.pallas import tpu as pltpu


# ----------------------------------------------------------------------------
# Kernel 1: hoisted input projection  gates = x @ [W_ih_f | W_ih_b] + [b_f|b_b]
# ----------------------------------------------------------------------------
def _proj_kernel(x_ref, w_ref, b_ref, g_ref):
    # x_ref: (Rc, H) bf16, w_ref: (H, 8*Hl) bf16, b_ref: (1, 8*Hl) f32
    g_ref[...] = (
        jnp.dot(x_ref[...], w_ref[...], preferred_element_type=jnp.float32)
        + b_ref[...]
    )


# ----------------------------------------------------------------------------
# Kernel 2: fused bidirectional layer-0 LSTM recurrence + output projection
# ----------------------------------------------------------------------------
def _bilstm_kernel(gf_ref, gb_ref, mf_ref, mb_ref,
                   whh_f_ref, whh_b_ref, wout_ref, bout_ref,
                   out_ref,
                   hf_s, cf_s, hb_s, cb_s):
    """Grid: time chunks ("arbitrary").  gf/gb: (Tc, B, 4*Hl) precomputed input
    gates (forward-ordered / reverse-ordered chunks).  mf/mb: (Tc, B, 1) validity
    masks.  h/c carried across grid steps in VMEM scratch."""
    Tc = gf_ref.shape[0]
    Hl = whh_f_ref.shape[0]

    @pl.when(pl.program_id(0) == 0)
    def _init():
        hf_s[...] = jnp.zeros_like(hf_s)
        cf_s[...] = jnp.zeros_like(cf_s)
        hb_s[...] = jnp.zeros_like(hb_s)
        cb_s[...] = jnp.zeros_like(cb_s)

    whh_f = whh_f_ref[...]          # (Hl, 4*Hl) bf16, resident across grid steps
    whh_b = whh_b_ref[...]

    def cell(g_pre, m, h, c, whh):
        # g_pre: (B, 4*Hl) f32 precomputed x@W_ih + b; only h@W_hh per step.
        gates = g_pre + jnp.dot(h.astype(jnp.bfloat16), whh,
                                preferred_element_type=jnp.float32)
        # sigmoid full width (i,f,o used; g's sigmoid is cheap EUP filler),
        # tanh only on the g slice.  Gate order i,f,g,o as in nn.LSTM.
        sig = jax.nn.sigmoid(gates)
        i_g = sig[:, 0 * Hl:1 * Hl]
        f_g = sig[:, 1 * Hl:2 * Hl]
        o_g = sig[:, 3 * Hl:4 * Hl]
        g_g = jnp.tanh(gates[:, 2 * Hl:3 * Hl])
        c_new = f_g * c + i_g * g_g
        h_new = o_g * jnp.tanh(c_new)
        # pack_padded_sequence semantics: padded steps never update h/c.
        h = m * h_new + (1.0 - m) * h
        c = m * c_new + (1.0 - m) * c
        return h, c

    def step(k, carry):
        h_f, c_f, h_b, c_b = carry
        # forward direction: local step k (global time = chunk*Tc + k, ascending)
        h_f, c_f = cell(gf_ref[k], mf_ref[k], h_f, c_f, whh_f)
        # backward direction: this ref holds the (nc-1-i)-th chunk; scanning its
        # local steps Tc-1..0 walks global time T-1..0 overall.
        kb = Tc - 1 - k
        h_b, c_b = cell(gb_ref[kb], mb_ref[kb], h_b, c_b, whh_b)
        return (h_f, c_f, h_b, c_b)

    h_f, c_f, h_b, c_b = lax.fori_loop(
        0, Tc, step,
        (hf_s[...], cf_s[...], hb_s[...], cb_s[...]),
        unroll=True)

    hf_s[...] = h_f
    cf_s[...] = c_f
    hb_s[...] = h_b
    cb_s[...] = c_b

    @pl.when(pl.program_id(0) == pl.num_programs(0) - 1)
    def _finalize():
        # dropout: identity (eval mode).
        # concat(h_f, h_b) @ W_out  ==  h_f @ W_out[:Hl] + h_b @ W_out[Hl:]
        # (two half-dots avoid an in-kernel lane concatenate).
        out_ref[...] = (
            jnp.dot(h_f.astype(jnp.bfloat16), wout_ref[:Hl, :],
                    preferred_element_type=jnp.float32)
            + jnp.dot(h_b.astype(jnp.bfloat16), wout_ref[Hl:, :],
                      preferred_element_type=jnp.float32)
            + bout_ref[...]
        )


# ----------------------------------------------------------------------------
# Wrapper
# ----------------------------------------------------------------------------
@functools.partial(jax.jit, static_argnames=("bert_layer_value", "time_chunk"))
def custom_bert2lstm_forward(hidden_states, sents_lengths, params, *,
                             bert_layer_value, time_chunk=4):
    """hidden_states: (num_layers+1, B, T, H) synthetic BERT stack.
       sents_lengths: (B,) int32.  Returns pre_softmax: (B, n_class) float32."""
    # --- glue (plain JAX): layer selection + permute(1, 0, 2) ---
    hidden_encoded_layer = hidden_states[bert_layer_value]       # (B, T, H)
    x_tm = jnp.transpose(hidden_encoded_layer, (1, 0, 2))        # (T, B, H) time-major

    T, B, H = x_tm.shape
    Hl = params["w_hh_f"].shape[0]
    n_class = params["w_out"].shape[1]
    Tc = min(time_chunk, T)
    assert T % Tc == 0, "time_chunk must divide the sequence length"
    nc = T // Tc

    f32 = jnp.float32
    bf16 = jnp.bfloat16

    # Validity mask (pack_padded_sequence semantics), computed once.
    lengths = sents_lengths.astype(jnp.int32)                    # (B,)
    t_idx = jnp.arange(T, dtype=jnp.int32)
    mask = (t_idx[:, None] < lengths[None, :]).astype(f32)[:, :, None]   # (T, B, 1)

    # ---- Kernel 1: hoisted input projection (one big matmul over all steps) ----
    w_cat = jnp.concatenate([params["w_ih_f"], params["w_ih_b"]], axis=1)  # (H, 8*Hl)
    b_cat = jnp.concatenate([params["b_f"], params["b_b"]], axis=1)        # (1, 8*Hl)

    rows = T * B
    Rc = Tc * B
    x_flat = x_tm.reshape(rows, H).astype(bf16)

    gates_flat = pl.pallas_call(
        _proj_kernel,
        out_shape=jax.ShapeDtypeStruct((rows, 8 * Hl), f32),
        grid=(rows // Rc,),
        in_specs=[
            pl.BlockSpec((Rc, H), lambda i: (i, 0)),
            pl.BlockSpec((H, 8 * Hl), lambda i: (0, 0)),
            pl.BlockSpec((1, 8 * Hl), lambda i: (0, 0)),
        ],
        out_specs=pl.BlockSpec((Rc, 8 * Hl), lambda i: (i, 0)),
        compiler_params=pltpu.CompilerParams(
            dimension_semantics=("parallel",)),
    )(x_flat, w_cat.astype(bf16), b_cat)

    # Layout-preserving reshape (row index = t*B + b).  Forward/backward gate
    # halves are selected inside kernel 2 via the BlockSpec block index on the
    # last axis -- no HBM slice copies here.
    gates = gates_flat.reshape(T, B, 8 * Hl)

    # ---- Output weights padded to a lane-dense (multiple of 128) width ----
    n_pad = ((n_class + 127) // 128) * 128
    w_out_pad = jnp.zeros((2 * Hl, n_pad), f32).at[:, :n_class].set(params["w_out"])
    b_out_pad = jnp.zeros((1, n_pad), f32).at[:, :n_class].set(params["b_out"])

    # ---- Kernel 2: fused bidirectional recurrence, gridded over time chunks ----
    out_padded = pl.pallas_call(
        _bilstm_kernel,
        out_shape=jax.ShapeDtypeStruct((B, n_pad), f32),
        grid=(nc,),
        in_specs=[
            pl.BlockSpec((Tc, B, 4 * Hl), lambda i: (i, 0, 0)),            # gates fwd half
            pl.BlockSpec((Tc, B, 4 * Hl), lambda i: (nc - 1 - i, 0, 1)),   # gates bwd half
            pl.BlockSpec((Tc, B, 1), lambda i: (i, 0, 0)),                 # mask fwd
            pl.BlockSpec((Tc, B, 1), lambda i: (nc - 1 - i, 0, 0)),        # mask bwd
            pl.BlockSpec((Hl, 4 * Hl), lambda i: (0, 0)),                  # W_hh fwd
            pl.BlockSpec((Hl, 4 * Hl), lambda i: (0, 0)),                  # W_hh bwd
            pl.BlockSpec((2 * Hl, n_pad), lambda i: (0, 0)),               # W_out
            pl.BlockSpec((1, n_pad), lambda i: (0, 0)),                    # b_out
        ],
        out_specs=pl.BlockSpec((B, n_pad), lambda i: (0, 0)),
        scratch_shapes=[pltpu.VMEM((B, Hl), f32) for _ in range(4)],  # h_f,c_f,h_b,c_b
        compiler_params=pltpu.CompilerParams(
            dimension_semantics=("arbitrary",)),
    )(gates, gates, mask, mask,
      params["w_hh_f"].astype(bf16), params["w_hh_b"].astype(bf16),
      w_out_pad.astype(bf16), b_out_pad)

    return out_padded[:, :n_class]


def init_params(key, hidden_size, lstm_hidden_size, n_class):
    """Deterministic synthetic parameters mirroring the PyTorch module's shapes
    (LSTM layer-0 forward/reverse weights, hidden_to_softmax Linear). Weights are
    stored pre-transposed ((in, out)) so the kernels do x @ W."""
    keys = jax.random.split(key, 10)
    k = 1.0 / jnp.sqrt(jnp.asarray(lstm_hidden_size, jnp.float32))

    def u(kk, shape):
        return jax.random.uniform(kk, shape, jnp.float32, minval=-k, maxval=k)

    H, Hl = hidden_size, lstm_hidden_size
    return {
        # forward direction, layer 0
        "w_ih_f": u(keys[0], (H, 4 * Hl)),          # (weight_ih_l0).T
        "w_hh_f": u(keys[1], (Hl, 4 * Hl)),         # (weight_hh_l0).T
        "b_f":    u(keys[2], (1, 4 * Hl)) + u(keys[3], (1, 4 * Hl)),   # b_ih + b_hh
        # reverse direction, layer 0
        "w_ih_b": u(keys[4], (H, 4 * Hl)),          # (weight_ih_l0_reverse).T
        "w_hh_b": u(keys[5], (Hl, 4 * Hl)),         # (weight_hh_l0_reverse).T
        "b_b":    u(keys[6], (1, 4 * Hl)) + u(keys[7], (1, 4 * Hl)),
        # hidden_to_softmax: Linear(2*Hl -> n_class), stored as (2*Hl, n_class)
        "w_out":  u(keys[8], (2 * Hl, n_class)),
        "b_out":  u(keys[9], (1, n_class)),
    }


def _ref_forward(hidden_states, sents_lengths, params, bert_layer_value):
    """Pure-JAX f32 reference of the same forward pass (for correctness check)."""
    x = jnp.transpose(hidden_states[bert_layer_value], (1, 0, 2))   # (T, B, H)
    T, B, _ = x.shape
    Hl = params["w_hh_f"].shape[0]

    def cell(x_t, h, c, w_ih, w_hh, b):
        gates = x_t @ w_ih + h @ w_hh + b
        i = jax.nn.sigmoid(gates[:, :Hl])
        f = jax.nn.sigmoid(gates[:, Hl:2 * Hl])
        g = jnp.tanh(gates[:, 2 * Hl:3 * Hl])
        o = jax.nn.sigmoid(gates[:, 3 * Hl:])
        c_new = f * c + i * g
        h_new = o * jnp.tanh(c_new)
        return h_new, c_new

    def run(direction_range, w_ih, w_hh, b):
        h = jnp.zeros((B, Hl), jnp.float32)
        c = jnp.zeros((B, Hl), jnp.float32)
        for t in direction_range:
            m = (t < sents_lengths).astype(jnp.float32)[:, None]
            h_new, c_new = cell(x[t], h, c, w_ih, w_hh, b)
            h = m * h_new + (1.0 - m) * h
            c = m * c_new + (1.0 - m) * c
        return h

    h_f = run(range(T), params["w_ih_f"], params["w_hh_f"], params["b_f"])
    h_b = run(range(T - 1, -1, -1), params["w_ih_b"], params["w_hh_b"], params["b_b"])
    feat = jnp.concatenate([h_f, h_b], axis=1)
    return feat @ params["w_out"] + params["b_out"]


if __name__ == "__main__":
    # Small shapes consistent with the module (BERT hidden / LSTM hidden tied, as
    # in the lstm_hidden_size=None default): batch=2, seq=8, hidden=32, n_class=4,
    # 4 synthetic "BERT" layers -> 5 hidden states, select layer 2.
    B, T, H, N_CLASS = 2, 8, 32, 4
    NUM_BERT_LAYERS = 4
    BERT_LAYER_VALUE = 2
    LSTM_HIDDEN = H  # module default: lstm_hidden_size = bert hidden_size

    root = jax.random.PRNGKey(0)
    k_hs, k_params = jax.random.split(root)

    # Synthetic BERT hidden-state stack (stands in for encoded_layers[2]).
    hidden_states = jax.random.normal(
        k_hs, (NUM_BERT_LAYERS + 1, B, T, H), dtype=jnp.float32)
    sents_lengths = jnp.array([T, 5], dtype=jnp.int32)  # ragged lengths, like packing

    params = init_params(k_params, H, LSTM_HIDDEN, N_CLASS)

    pre_softmax = custom_bert2lstm_forward(
        hidden_states, sents_lengths, params,
        bert_layer_value=BERT_LAYER_VALUE, time_chunk=4)
    pre_softmax = jax.block_until_ready(pre_softmax)

    assert pre_softmax.shape == (B, N_CLASS)
    assert pre_softmax.dtype == jnp.float32
    assert bool(jnp.all(jnp.isfinite(pre_softmax)))

    # Correctness vs pure-JAX f32 reference (kernel uses bf16 matmul operands).
    ref = _ref_forward(hidden_states, sents_lengths, params, BERT_LAYER_VALUE)
    assert bool(jnp.allclose(pre_softmax, ref, atol=5e-2, rtol=5e-2)), (
        float(jnp.max(jnp.abs(pre_softmax - ref))))

    print("KERNEL_OK")
</pallas_src>

<mosaic_0001>
module attributes {stable_mosaic.version = 11 : i64} {
  func.func @_proj_kernel(%arg0: i32, %arg1: memref<8x32xbf16, #tpu.memory_space<vmem>>, %arg2: memref<32x256xbf16, #tpu.memory_space<vmem>>, %arg3: memref<1x256xf32, #tpu.memory_space<vmem>>, %arg4: memref<8x256xf32, #tpu.memory_space<vmem>>) attributes {dimension_semantics = [#tpu.dimension_semantics<parallel>], iteration_bounds = array<i64: 2>, scalar_prefetch = 0 : i64, scratch_operands = 0 : i64, tpu.core_type = #tpu.core_type<tc>, window_params = [{transform_indices = @transform_0, window_bounds = array<i64: 8, 32>}, {pipeline_mode = #tpu.pipeline_mode<synchronous>, transform_indices = @transform_1, window_bounds = array<i64: 32, 256>}, {pipeline_mode = #tpu.pipeline_mode<synchronous>, transform_indices = @transform_2, window_bounds = array<i64: 1, 256>}, {transform_indices = @transform_3, window_bounds = array<i64: 8, 256>}]} {
    %c0 = arith.constant 0 : index
    %c0_0 = arith.constant 0 : index
    %0 = vector.load %arg1[%c0, %c0_0] : memref<8x32xbf16, #tpu.memory_space<vmem>>, vector<8x32xbf16>
    %c0_1 = arith.constant 0 : index
    %c0_2 = arith.constant 0 : index
    %1 = vector.load %arg2[%c0_1, %c0_2] : memref<32x256xbf16, #tpu.memory_space<vmem>>, vector<32x256xbf16>
    %cst = arith.constant dense<0.000000e+00> : vector<8x256xf32>
    %2 = tpu.matmul %0, %1, %cst {dimension_numbers = #tpu.dot_dimension_numbers<[1], [0], [0], [1], [0, 0, 1, 1], [], []>} : vector<8x32xbf16>, vector<32x256xbf16>, vector<8x256xf32> -> vector<8x256xf32>
    %c0_3 = arith.constant 0 : index
    %c0_4 = arith.constant 0 : index
    %3 = vector.load %arg3[%c0_3, %c0_4] : memref<1x256xf32, #tpu.memory_space<vmem>>, vector<1x256xf32>
    %4 = vector.broadcast %3 : vector<1x256xf32> to vector<8x256xf32>
    %5 = arith.addf %2, %4 : vector<8x256xf32>
    %c0_5 = arith.constant 0 : index
    %c0_6 = arith.constant 0 : index
    %6 = vector.load %arg4[%c0_5, %c0_6] : memref<8x256xf32, #tpu.memory_space<vmem>>, vector<8x256xf32>
    tpu.vector_store %arg4[%c0_5, %c0_6], %5 {strides = array<i32>} : memref<8x256xf32, #tpu.memory_space<vmem>>, vector<8x256xf32>,
    return
  }
  func.func @transform_0(%arg0: i32) -> (i32, i32) {
    %c0_i32 = arith.constant 0 : i32
    %c0_i32_0 = arith.constant 0 : i32
    return %arg0, %c0_i32 : i32, i32
  }
  func.func @transform_1(%arg0: i32) -> (i32, i32) {
    %c0_i32 = arith.constant 0 : i32
    %c0_i32_0 = arith.constant 0 : i32
    %c0_i32_1 = arith.constant 0 : i32
    return %c0_i32, %c0_i32_0 : i32, i32
  }
  func.func @transform_2(%arg0: i32) -> (i32, i32) {
    %c0_i32 = arith.constant 0 : i32
    %c0_i32_0 = arith.constant 0 : i32
    %c0_i32_1 = arith.constant 0 : i32
    return %c0_i32, %c0_i32_0 : i32, i32
  }
  func.func @transform_3(%arg0: i32) -> (i32, i32) {
    %c0_i32 = arith.constant 0 : i32
    %c0_i32_0 = arith.constant 0 : i32
    return %arg0, %c0_i32 : i32, i32
  }
}

module attributes {stable_mosaic.version = 11 : i64} {
  func.func @_bilstm_kernel(%arg0: i32, %arg1: memref<4x2x128xf32, #tpu.memory_space<vmem>>, %arg2: memref<4x2x128xf32, #tpu.memory_space<vmem>>, %arg3: memref<4x2x1xf32, #tpu.memory_space<vmem>>, %arg4: memref<4x2x1xf32, #tpu.memory_space<vmem>>, %arg5: memref<32x128xbf16, #tpu.memory_space<vmem>>, %arg6: memref<32x128xbf16, #tpu.memory_space<vmem>>, %arg7: memref<64x128xbf16, #tpu.memory_space<vmem>>, %arg8: memref<1x128xf32, #tpu.memory_space<vmem>>, %arg9: memref<2x128xf32, #tpu.memory_space<vmem>>, %arg10: memref<2x32xf32, #tpu.memory_space<vmem>>, %arg11: memref<2x32xf32, #tpu.memory_space<vmem>>, %arg12: memref<2x32xf32, #tpu.memory_space<vmem>>, %arg13: memref<2x32xf32, #tpu.memory_space<vmem>>) attributes {dimension_semantics = [#tpu.dimension_semantics<arbitrary>], iteration_bounds = array<i64: 2>, scalar_prefetch = 0 : i64, scratch_operands = 4 : i64, tpu.core_type = #tpu.core_type<tc>, window_params = [{transform_indices = @transform_0, window_bounds = array<i64: 4, 2, 128>}, {transform_indices = @transform_1, window_bounds = array<i64: 4, 2, 128>}, {transform_indices = @transform_2, window_bounds = array<i64: 4, 2, 1>}, {transform_indices = @transform_3, window_bounds = array<i64: 4, 2, 1>}, {pipeline_mode = #tpu.pipeline_mode<synchronous>, transform_indices = @transform_4, window_bounds = array<i64: 32, 128>}, {pipeline_mode = #tpu.pipeline_mode<synchronous>, transform_indices = @transform_5, window_bounds = array<i64: 32, 128>}, {pipeline_mode = #tpu.pipeline_mode<synchronous>, transform_indices = @transform_6, window_bounds = array<i64: 64, 128>}, {pipeline_mode = #tpu.pipeline_mode<synchronous>, transform_indices = @transform_7, window_bounds = array<i64: 1, 128>}, {pipeline_mode = #tpu.pipeline_mode<synchronous>, transform_indices = @transform_8, window_bounds = array<i64: 2, 128>}]} {
    %c0_i32 = arith.constant 0 : i32
    %0 = arith.cmpi eq, %arg0, %c0_i32 : i32
    %1 = arith.extui %0 : i1 to i32
    %c0_i32_0 = arith.constant 0 : i32
    %2 = arith.cmpi ne, %1, %c0_i32_0 : i32
    scf.if %2 {
      %cst_90 = arith.constant 0.000000e+00 : f32
      %324 = vector.broadcast %cst_90 : f32 to vector<2x32xf32>
      %c0_91 = arith.constant 0 : index
      %c0_92 = arith.constant 0 : index
      %325 = vector.load %arg10[%c0_91, %c0_92] : memref<2x32xf32, #tpu.memory_space<vmem>>, vector<2x32xf32>
      tpu.vector_store %arg10[%c0_91, %c0_92], %324 {strides = array<i32>} : memref<2x32xf32, #tpu.memory_space<vmem>>, vector<2x32xf32>,
      %cst_93 = arith.constant 0.000000e+00 : f32
      %326 = vector.broadcast %cst_93 : f32 to vector<2x32xf32>
      %c0_94 = arith.constant 0 : index
      %c0_95 = arith.constant 0 : index
      %327 = vector.load %arg11[%c0_94, %c0_95] : memref<2x32xf32, #tpu.memory_space<vmem>>, vector<2x32xf32>
      tpu.vector_store %arg11[%c0_94, %c0_95], %326 {strides = array<i32>} : memref<2x32xf32, #tpu.memory_space<vmem>>, vector<2x32xf32>,
      %cst_96 = arith.constant 0.000000e+00 : f32
      %328 = vector.broadcast %cst_96 : f32 to vector<2x32xf32>
      %c0_97 = arith.constant 0 : index
      %c0_98 = arith.constant 0 : index
      %329 = vector.load %arg12[%c0_97, %c0_98] : memref<2x32xf32, #tpu.memory_space<vmem>>, vector<2x32xf32>
      tpu.vector_store %arg12[%c0_97, %c0_98], %328 {strides = array<i32>} : memref<2x32xf32, #tpu.memory_space<vmem>>, vector<2x32xf32>,
      %cst_99 = arith.constant 0.000000e+00 : f32
      %330 = vector.broadcast %cst_99 : f32 to vector<2x32xf32>
      %c0_100 = arith.constant 0 : index
      %c0_101 = arith.constant 0 : index
      %331 = vector.load %arg13[%c0_100, %c0_101] : memref<2x32xf32, #tpu.memory_space<vmem>>, vector<2x32xf32>
      tpu.vector_store %arg13[%c0_100, %c0_101], %330 {strides = array<i32>} : memref<2x32xf32, #tpu.memory_space<vmem>>, vector<2x32xf32>,
    } else {
    }
    %c0 = arith.constant 0 : index
    %c0_1 = arith.constant 0 : index
    %3 = vector.load %arg5[%c0, %c0_1] : memref<32x128xbf16, #tpu.memory_space<vmem>>, vector<32x128xbf16>
    %c0_2 = arith.constant 0 : index
    %c0_3 = arith.constant 0 : index
    %4 = vector.load %arg6[%c0_2, %c0_3] : memref<32x128xbf16, #tpu.memory_space<vmem>>, vector<32x128xbf16>
    %c0_4 = arith.constant 0 : index
    %c0_5 = arith.constant 0 : index
    %5 = vector.load %arg10[%c0_4, %c0_5] : memref<2x32xf32, #tpu.memory_space<vmem>>, vector<2x32xf32>
    %c0_6 = arith.constant 0 : index
    %c0_7 = arith.constant 0 : index
    %6 = vector.load %arg11[%c0_6, %c0_7] : memref<2x32xf32, #tpu.memory_space<vmem>>, vector<2x32xf32>
    %c0_8 = arith.constant 0 : index
    %c0_9 = arith.constant 0 : index
    %7 = vector.load %arg12[%c0_8, %c0_9] : memref<2x32xf32, #tpu.memory_space<vmem>>, vector<2x32xf32>
    %c0_10 = arith.constant 0 : index
    %c0_11 = arith.constant 0 : index
    %8 = vector.load %arg13[%c0_10, %c0_11] : memref<2x32xf32, #tpu.memory_space<vmem>>, vector<2x32xf32>
    %c0_i32_12 = arith.constant 0 : i32
    %9 = arith.index_cast %c0_i32_12 : i32 to index
    %c0_13 = arith.constant 0 : index
    %c0_14 = arith.constant 0 : index
    %10 = vector.load %arg1[%9, %c0_13, %c0_14] : memref<4x2x128xf32, #tpu.memory_space<vmem>>, vector<1x2x128xf32>
    %11 = vector.shape_cast %10 : vector<1x2x128xf32> to vector<2x128xf32>
    %12 = arith.index_cast %c0_i32_12 : i32 to index
    %c0_15 = arith.constant 0 : index
    %c0_16 = arith.constant 0 : index
    %13 = vector.load %arg3[%12, %c0_15, %c0_16] : memref<4x2x1xf32, #tpu.memory_space<vmem>>, vector<1x2x1xf32>
    %14 = vector.shape_cast %13 : vector<1x2x1xf32> to vector<2x1xf32>
    %15 = arith.truncf %5 : vector<2x32xf32> to vector<2x32xbf16>
    %cst = arith.constant dense<0.000000e+00> : vector<2x128xf32>
    %16 = tpu.matmul %15, %3, %cst {dimension_numbers = #tpu.dot_dimension_numbers<[1], [0], [0], [1], [0, 0, 1, 1], [], []>} : vector<2x32xbf16>, vector<32x128xbf16>, vector<2x128xf32> -> vector<2x128xf32>
    %17 = arith.addf %11, %16 : vector<2x128xf32>
    %18 = arith.negf %17 : vector<2x128xf32>
    %19 = math.exp %18 : vector<2x128xf32>
    %cst_17 = arith.constant 1.000000e+00 : f32
    %20 = vector.broadcast %cst_17 : f32 to vector<2x128xf32>
    %21 = arith.addf %20, %19 : vector<2x128xf32>
    %22 = arith.divf %20, %21 : vector<2x128xf32>
    %23 = vector.extract_strided_slice %22 {offsets = [0, 0], sizes = [2, 32], strides = [1, 1]} : vector<2x128xf32> to vector<2x32xf32>
    %24 = vector.extract_strided_slice %22 {offsets = [0, 32], sizes = [2, 32], strides = [1, 1]} : vector<2x128xf32> to vector<2x32xf32>
    %25 = vector.extract_strided_slice %22 {offsets = [0, 96], sizes = [2, 32], strides = [1, 1]} : vector<2x128xf32> to vector<2x32xf32>
    %26 = vector.extract_strided_slice %17 {offsets = [0, 64], sizes = [2, 32], strides = [1, 1]} : vector<2x128xf32> to vector<2x32xf32>
    %27 = math.tanh %26 : vector<2x32xf32>
    %28 = arith.mulf %24, %6 : vector<2x32xf32>
    %29 = arith.mulf %23, %27 : vector<2x32xf32>
    %30 = arith.addf %28, %29 : vector<2x32xf32>
    %31 = math.tanh %30 : vector<2x32xf32>
    %32 = arith.mulf %25, %31 : vector<2x32xf32>
    %33 = vector.broadcast %14 : vector<2x1xf32> to vector<2x32xf32>
    %34 = arith.mulf %33, %32 : vector<2x32xf32>
    %cst_18 = arith.constant 1.000000e+00 : f32
    %35 = vector.broadcast %cst_18 : f32 to vector<2x1xf32>
    %36 = arith.subf %35, %14 : vector<2x1xf32>
    %37 = vector.broadcast %36 : vector<2x1xf32> to vector<2x32xf32>
    %38 = arith.mulf %37, %5 : vector<2x32xf32>
    %39 = arith.addf %34, %38 : vector<2x32xf32>
    %40 = vector.broadcast %14 : vector<2x1xf32> to vector<2x32xf32>
    %41 = arith.mulf %40, %30 : vector<2x32xf32>
    %cst_19 = arith.constant 1.000000e+00 : f32
    %42 = vector.broadcast %cst_19 : f32 to vector<2x1xf32>
    %43 = arith.subf %42, %14 : vector<2x1xf32>
    %44 = vector.broadcast %43 : vector<2x1xf32> to vector<2x32xf32>
    %45 = arith.mulf %44, %6 : vector<2x32xf32>
    %46 = arith.addf %41, %45 : vector<2x32xf32>
    %c3_i32 = arith.constant 3 : i32
    %47 = arith.subi %c3_i32, %c0_i32_12 : i32
    %48 = arith.index_cast %47 : i32 to index
    %c0_20 = arith.constant 0 : index
    %c0_21 = arith.constant 0 : index
    %49 = vector.load %arg2[%48, %c0_20, %c0_21] : memref<4x2x128xf32, #tpu.memory_space<vmem>>, vector<1x2x128xf32>
    %50 = vector.shape_cast %49 : vector<1x2x128xf32> to vector<2x128xf32>
    %51 = arith.index_cast %47 : i32 to index
    %c0_22 = arith.constant 0 : index
    %c0_23 = arith.constant 0 : index
    %52 = vector.load %arg4[%51, %c0_22, %c0_23] : memref<4x2x1xf32, #tpu.memory_space<vmem>>, vector<1x2x1xf32>
    %53 = vector.shape_cast %52 : vector<1x2x1xf32> to vector<2x1xf32>
    %54 = arith.truncf %7 : vector<2x32xf32> to vector<2x32xbf16>
    %cst_24 = arith.constant dense<0.000000e+00> : vector<2x128xf32>
    %55 = tpu.matmul %54, %4, %cst_24 {dimension_numbers = #tpu.dot_dimension_numbers<[1], [0], [0], [1], [0, 0, 1, 1], [], []>} : vector<2x32xbf16>, vector<32x128xbf16>, vector<2x128xf32> -> vector<2x128xf32>
    %56 = arith.addf %50, %55 : vector<2x128xf32>
    %57 = arith.negf %56 : vector<2x128xf32>
    %58 = math.exp %57 : vector<2x128xf32>
    %cst_25 = arith.constant 1.000000e+00 : f32
    %59 = vector.broadcast %cst_25 : f32 to vector<2x128xf32>
    %60 = arith.addf %59, %58 : vector<2x128xf32>
    %61 = arith.divf %59, %60 : vector<2x128xf32>
    %62 = vector.extract_strided_slice %61 {offsets = [0, 0], sizes = [2, 32], strides = [1, 1]} : vector<2x128xf32> to vector<2x32xf32>
    %63 = vector.extract_strided_slice %61 {offsets = [0, 32], sizes = [2, 32], strides = [1, 1]} : vector<2x128xf32> to vector<2x32xf32>
    %64 = vector.extract_strided_slice %61 {offsets = [0, 96], sizes = [2, 32], strides = [1, 1]} : vector<2x128xf32> to vector<2x32xf32>
    %65 = vector.extract_strided_slice %56 {offsets = [0, 64], sizes = [2, 32], strides = [1, 1]} : vector<2x128xf32> to vector<2x32xf32>
    %66 = math.tanh %65 : vector<2x32xf32>
    %67 = arith.mulf %63, %8 : vector<2x32xf32>
    %68 = arith.mulf %62, %66 : vector<2x32xf32>
    %69 = arith.addf %67, %68 : vector<2x32xf32>
    %70 = math.tanh %69 : vector<2x32xf32>
    %71 = arith.mulf %64, %70 : vector<2x32xf32>
    %72 = vector.broadcast %53 : vector<2x1xf32> to vector<2x32xf32>
    %73 = arith.mulf %72, %71 : vector<2x32xf32>
    %cst_26 = arith.constant 1.000000e+00 : f32
    %74 = vector.broadcast %cst_26 : f32 to vector<2x1xf32>
    %75 = arith.subf %74, %53 : vector<2x1xf32>
    %76 = vector.broadcast %75 : vector<2x1xf32> to vector<2x32xf32>
    %77 = arith.mulf %76, %7 : vector<2x32xf32>
    %78 = arith.addf %73, %77 : vector<2x32xf32>
    %79 = vector.broadcast %53 : vector<2x1xf32> to vector<2x32xf32>
    %80 = arith.mulf %79, %69 : vector<2x32xf32>
    %cst_27 = arith.constant 1.000000e+00 : f32
    %81 = vector.broadcast %cst_27 : f32 to vector<2x1xf32>
    %82 = arith.subf %81, %53 : vector<2x1xf32>
    %83 = vector.broadcast %82 : vector<2x1xf32> to vector<2x32xf32>
    %84 = arith.mulf %83, %8 : vector<2x32xf32>
    %85 = arith.addf %80, %84 : vector<2x32xf32>
    %c1_i32 = arith.constant 1 : i32
    %86 = arith.index_cast %c1_i32 : i32 to index
    %c0_28 = arith.constant 0 : index
    %c0_29 = arith.constant 0 : index
    %87 = vector.load %arg1[%86, %c0_28, %c0_29] : memref<4x2x128xf32, #tpu.memory_space<vmem>>, vector<1x2x128xf32>
    %88 = vector.shape_cast %87 : vector<1x2x128xf32> to vector<2x128xf32>
    %89 = arith.index_cast %c1_i32 : i32 to index
    %c0_30 = arith.constant 0 : index
    %c0_31 = arith.constant 0 : index
    %90 = vector.load %arg3[%89, %c0_30, %c0_31] : memref<4x2x1xf32, #tpu.memory_space<vmem>>, vector<1x2x1xf32>
    %91 = vector.shape_cast %90 : vector<1x2x1xf32> to vector<2x1xf32>
    %92 = arith.truncf %39 : vector<2x32xf32> to vector<2x32xbf16>
    %cst_32 = arith.constant dense<0.000000e+00> : vector<2x128xf32>
    %93 = tpu.matmul %92, %3, %cst_32 {dimension_numbers = #tpu.dot_dimension_numbers<[1], [0], [0], [1], [0, 0, 1, 1], [], []>} : vector<2x32xbf16>, vector<32x128xbf16>, vector<2x128xf32> -> vector<2x128xf32>
    %94 = arith.addf %88, %93 : vector<2x128xf32>
    %95 = arith.negf %94 : vector<2x128xf32>
    %96 = math.exp %95 : vector<2x128xf32>
    %cst_33 = arith.constant 1.000000e+00 : f32
    %97 = vector.broadcast %cst_33 : f32 to vector<2x128xf32>
    %98 = arith.addf %97, %96 : vector<2x128xf32>
    %99 = arith.divf %97, %98 : vector<2x128xf32>
    %100 = vector.extract_strided_slice %99 {offsets = [0, 0], sizes = [2, 32], strides = [1, 1]} : vector<2x128xf32> to vector<2x32xf32>
    %101 = vector.extract_strided_slice %99 {offsets = [0, 32], sizes = [2, 32], strides = [1, 1]} : vector<2x128xf32> to vector<2x32xf32>
    %102 = vector.extract_strided_slice %99 {offsets = [0, 96], sizes = [2, 32], strides = [1, 1]} : vector<2x128xf32> to vector<2x32xf32>
    %103 = vector.extract_strided_slice %94 {offsets = [0, 64], sizes = [2, 32], strides = [1, 1]} : vector<2x128xf32> to vector<2x32xf32>
    %104 = math.tanh %103 : vector<2x32xf32>
    %105 = arith.mulf %101, %46 : vector<2x32xf32>
    %106 = arith.mulf %100, %104 : vector<2x32xf32>
    %107 = arith.addf %105, %106 : vector<2x32xf32>
    %108 = math.tanh %107 : vector<2x32xf32>
    %109 = arith.mulf %102, %108 : vector<2x32xf32>
    %110 = vector.broadcast %91 : vector<2x1xf32> to vector<2x32xf32>
    %111 = arith.mulf %110, %109 : vector<2x32xf32>
    %cst_34 = arith.constant 1.000000e+00 : f32
    %112 = vector.broadcast %cst_34 : f32 to vector<2x1xf32>
    %113 = arith.subf %112, %91 : vector<2x1xf32>
    %114 = vector.broadcast %113 : vector<2x1xf32> to vector<2x32xf32>
    %115 = arith.mulf %114, %39 : vector<2x32xf32>
    %116 = arith.addf %111, %115 : vector<2x32xf32>
    %117 = vector.broadcast %91 : vector<2x1xf32> to vector<2x32xf32>
    %118 = arith.mulf %117, %107 : vector<2x32xf32>
    %cst_35 = arith.constant 1.000000e+00 : f32
    %119 = vector.broadcast %cst_35 : f32 to vector<2x1xf32>
    %120 = arith.subf %119, %91 : vector<2x1xf32>
    %121 = vector.broadcast %120 : vector<2x1xf32> to vector<2x32xf32>
    %122 = arith.mulf %121, %46 : vector<2x32xf32>
    %123 = arith.addf %118, %122 : vector<2x32xf32>
    %c3_i32_36 = arith.constant 3 : i32
    %124 = arith.subi %c3_i32_36, %c1_i32 : i32
    %125 = arith.index_cast %124 : i32 to index
    %c0_37 = arith.constant 0 : index
    %c0_38 = arith.constant 0 : index
    %126 = vector.load %arg2[%125, %c0_37, %c0_38] : memref<4x2x128xf32, #tpu.memory_space<vmem>>, vector<1x2x128xf32>
    %127 = vector.shape_cast %126 : vector<1x2x128xf32> to vector<2x128xf32>
    %128 = arith.index_cast %124 : i32 to index
    %c0_39 = arith.constant 0 : index
    %c0_40 = arith.constant 0 : index
    %129 = vector.load %arg4[%128, %c0_39, %c0_40] : memref<4x2x1xf32, #tpu.memory_space<vmem>>, vector<1x2x1xf32>
    %130 = vector.shape_cast %129 : vector<1x2x1xf32> to vector<2x1xf32>
    %131 = arith.truncf %78 : vector<2x32xf32> to vector<2x32xbf16>
    %cst_41 = arith.constant dense<0.000000e+00> : vector<2x128xf32>
    %132 = tpu.matmul %131, %4, %cst_41 {dimension_numbers = #tpu.dot_dimension_numbers<[1], [0], [0], [1], [0, 0, 1, 1], [], []>} : vector<2x32xbf16>, vector<32x128xbf16>, vector<2x128xf32> -> vector<2x128xf32>
    %133 = arith.addf %127, %132 : vector<2x128xf32>
    %134 = arith.negf %133 : vector<2x128xf32>
    %135 = math.exp %134 : vector<2x128xf32>
    %cst_42 = arith.constant 1.000000e+00 : f32
    %136 = vector.broadcast %cst_42 : f32 to vector<2x128xf32>
    %137 = arith.addf %136, %135 : vector<2x128xf32>
    %138 = arith.divf %136, %137 : vector<2x128xf32>
    %139 = vector.extract_strided_slice %138 {offsets = [0, 0], sizes = [2, 32], strides = [1, 1]} : vector<2x128xf32> to vector<2x32xf32>
    %140 = vector.extract_strided_slice %138 {offsets = [0, 32], sizes = [2, 32], strides = [1, 1]} : vector<2x128xf32> to vector<2x32xf32>
    %141 = vector.extract_strided_slice %138 {offsets = [0, 96], sizes = [2, 32], strides = [1, 1]} : vector<2x128xf32> to vector<2x32xf32>
    %142 = vector.extract_strided_slice %133 {offsets = [0, 64], sizes = [2, 32], strides = [1, 1]} : vector<2x128xf32> to vector<2x32xf32>
    %143 = math.tanh %142 : vector<2x32xf32>
    %144 = arith.mulf %140, %85 : vector<2x32xf32>
    %145 = arith.mulf %139, %143 : vector<2x32xf32>
    %146 = arith.addf %144, %145 : vector<2x32xf32>
    %147 = math.tanh %146 : vector<2x32xf32>
    %148 = arith.mulf %141, %147 : vector<2x32xf32>
    %149 = vector.broadcast %130 : vector<2x1xf32> to vector<2x32xf32>
    %150 = arith.mulf %149, %148 : vector<2x32xf32>
    %cst_43 = arith.constant 1.000000e+00 : f32
    %151 = vector.broadcast %cst_43 : f32 to vector<2x1xf32>
    %152 = arith.subf %151, %130 : vector<2x1xf32>
    %153 = vector.broadcast %152 : vector<2x1xf32> to vector<2x32xf32>
    %154 = arith.mulf %153, %78 : vector<2x32xf32>
    %155 = arith.addf %150, %154 : vector<2x32xf32>
    %156 = vector.broadcast %130 : vector<2x1xf32> to vector<2x32xf32>
    %157 = arith.mulf %156, %146 : vector<2x32xf32>
    %cst_44 = arith.constant 1.000000e+00 : f32
    %158 = vector.broadcast %cst_44 : f32 to vector<2x1xf32>
    %159 = arith.subf %158, %130 : vector<2x1xf32>
    %160 = vector.broadcast %159 : vector<2x1xf32> to vector<2x32xf32>
    %161 = arith.mulf %160, %85 : vector<2x32xf32>
    %162 = arith.addf %157, %161 : vector<2x32xf32>
    %c2_i32 = arith.constant 2 : i32
    %163 = arith.index_cast %c2_i32 : i32 to index
    %c0_45 = arith.constant 0 : index
    %c0_46 = arith.constant 0 : index
    %164 = vector.load %arg1[%163, %c0_45, %c0_46] : memref<4x2x128xf32, #tpu.memory_space<vmem>>, vector<1x2x128xf32>
    %165 = vector.shape_cast %164 : vector<1x2x128xf32> to vector<2x128xf32>
    %166 = arith.index_cast %c2_i32 : i32 to index
    %c0_47 = arith.constant 0 : index
    %c0_48 = arith.constant 0 : index
    %167 = vector.load %arg3[%166, %c0_47, %c0_48] : memref<4x2x1xf32, #tpu.memory_space<vmem>>, vector<1x2x1xf32>
    %168 = vector.shape_cast %167 : vector<1x2x1xf32> to vector<2x1xf32>
    %169 = arith.truncf %116 : vector<2x32xf32> to vector<2x32xbf16>
    %cst_49 = arith.constant dense<0.000000e+00> : vector<2x128xf32>
    %170 = tpu.matmul %169, %3, %cst_49 {dimension_numbers = #tpu.dot_dimension_numbers<[1], [0], [0], [1], [0, 0, 1, 1], [], []>} : vector<2x32xbf16>, vector<32x128xbf16>, vector<2x128xf32> -> vector<2x128xf32>
    %171 = arith.addf %165, %170 : vector<2x128xf32>
    %172 = arith.negf %171 : vector<2x128xf32>
    %173 = math.exp %172 : vector<2x128xf32>
    %cst_50 = arith.constant 1.000000e+00 : f32
    %174 = vector.broadcast %cst_50 : f32 to vector<2x128xf32>
    %175 = arith.addf %174, %173 : vector<2x128xf32>
    %176 = arith.divf %174, %175 : vector<2x128xf32>
    %177 = vector.extract_strided_slice %176 {offsets = [0, 0], sizes = [2, 32], strides = [1, 1]} : vector<2x128xf32> to vector<2x32xf32>
    %178 = vector.extract_strided_slice %176 {offsets = [0, 32], sizes = [2, 32], strides = [1, 1]} : vector<2x128xf32> to vector<2x32xf32>
    %179 = vector.extract_strided_slice %176 {offsets = [0, 96], sizes = [2, 32], strides = [1, 1]} : vector<2x128xf32> to vector<2x32xf32>
    %180 = vector.extract_strided_slice %171 {offsets = [0, 64], sizes = [2, 32], strides = [1, 1]} : vector<2x128xf32> to vector<2x32xf32>
    %181 = math.tanh %180 : vector<2x32xf32>
    %182 = arith.mulf %178, %123 : vector<2x32xf32>
    %183 = arith.mulf %177, %181 : vector<2x32xf32>
    %184 = arith.addf %182, %183 : vector<2x32xf32>
    %185 = math.tanh %184 : vector<2x32xf32>
    %186 = arith.mulf %179, %185 : vector<2x32xf32>
    %187 = vector.broadcast %168 : vector<2x1xf32> to vector<2x32xf32>
    %188 = arith.mulf %187, %186 : vector<2x32xf32>
    %cst_51 = arith.constant 1.000000e+00 : f32
    %189 = vector.broadcast %cst_51 : f32 to vector<2x1xf32>
    %190 = arith.subf %189, %168 : vector<2x1xf32>
    %191 = vector.broadcast %190 : vector<2x1xf32> to vector<2x32xf32>
    %192 = arith.mulf %191, %116 : vector<2x32xf32>
    %193 = arith.addf %188, %192 : vector<2x32xf32>
    %194 = vector.broadcast %168 : vector<2x1xf32> to vector<2x32xf32>
    %195 = arith.mulf %194, %184 : vector<2x32xf32>
    %cst_52 = arith.constant 1.000000e+00 : f32
    %196 = vector.broadcast %cst_52 : f32 to vector<2x1xf32>
    %197 = arith.subf %196, %168 : vector<2x1xf32>
    %198 = vector.broadcast %197 : vector<2x1xf32> to vector<2x32xf32>
    %199 = arith.mulf %198, %123 : vector<2x32xf32>
    %200 = arith.addf %195, %199 : vector<2x32xf32>
    %c3_i32_53 = arith.constant 3 : i32
    %201 = arith.subi %c3_i32_53, %c2_i32 : i32
    %202 = arith.index_cast %201 : i32 to index
    %c0_54 = arith.constant 0 : index
    %c0_55 = arith.constant 0 : index
    %203 = vector.load %arg2[%202, %c0_54, %c0_55] : memref<4x2x128xf32, #tpu.memory_space<vmem>>, vector<1x2x128xf32>
    %204 = vector.shape_cast %203 : vector<1x2x128xf32> to vector<2x128xf32>
    %205 = arith.index_cast %201 : i32 to index
    %c0_56 = arith.constant 0 : index
    %c0_57 = arith.constant 0 : index
    %206 = vector.load %arg4[%205, %c0_56, %c0_57] : memref<4x2x1xf32, #tpu.memory_space<vmem>>, vector<1x2x1xf32>
    %207 = vector.shape_cast %206 : vector<1x2x1xf32> to vector<2x1xf32>
    %208 = arith.truncf %155 : vector<2x32xf32> to vector<2x32xbf16>
    %cst_58 = arith.constant dense<0.000000e+00> : vector<2x128xf32>
    %209 = tpu.matmul %208, %4, %cst_58 {dimension_numbers = #tpu.dot_dimension_numbers<[1], [0], [0], [1], [0, 0, 1, 1], [], []>} : vector<2x32xbf16>, vector<32x128xbf16>, vector<2x128xf32> -> vector<2x128xf32>
    %210 = arith.addf %204, %209 : vector<2x128xf32>
    %211 = arith.negf %210 : vector<2x128xf32>
    %212 = math.exp %211 : vector<2x128xf32>
    %cst_59 = arith.constant 1.000000e+00 : f32
    %213 = vector.broadcast %cst_59 : f32 to vector<2x128xf32>
    %214 = arith.addf %213, %212 : vector<2x128xf32>
    %215 = arith.divf %213, %214 : vector<2x128xf32>
    %216 = vector.extract_strided_slice %215 {offsets = [0, 0], sizes = [2, 32], strides = [1, 1]} : vector<2x128xf32> to vector<2x32xf32>
    %217 = vector.extract_strided_slice %215 {offsets = [0, 32], sizes = [2, 32], strides = [1, 1]} : vector<2x128xf32> to vector<2x32xf32>
    %218 = vector.extract_strided_slice %215 {offsets = [0, 96], sizes = [2, 32], strides = [1, 1]} : vector<2x128xf32> to vector<2x32xf32>
    %219 = vector.extract_strided_slice %210 {offsets = [0, 64], sizes = [2, 32], strides = [1, 1]} : vector<2x128xf32> to vector<2x32xf32>
    %220 = math.tanh %219 : vector<2x32xf32>
    %221 = arith.mulf %217, %162 : vector<2x32xf32>
    %222 = arith.mulf %216, %220 : vector<2x32xf32>
    %223 = arith.addf %221, %222 : vector<2x32xf32>
    %224 = math.tanh %223 : vector<2x32xf32>
    %225 = arith.mulf %218, %224 : vector<2x32xf32>
    %226 = vector.broadcast %207 : vector<2x1xf32> to vector<2x32xf32>
    %227 = arith.mulf %226, %225 : vector<2x32xf32>
    %cst_60 = arith.constant 1.000000e+00 : f32
    %228 = vector.broadcast %cst_60 : f32 to vector<2x1xf32>
    %229 = arith.subf %228, %207 : vector<2x1xf32>
    %230 = vector.broadcast %229 : vector<2x1xf32> to vector<2x32xf32>
    %231 = arith.mulf %230, %155 : vector<2x32xf32>
    %232 = arith.addf %227, %231 : vector<2x32xf32>
    %233 = vector.broadcast %207 : vector<2x1xf32> to vector<2x32xf32>
    %234 = arith.mulf %233, %223 : vector<2x32xf32>
    %cst_61 = arith.constant 1.000000e+00 : f32
    %235 = vector.broadcast %cst_61 : f32 to vector<2x1xf32>
    %236 = arith.subf %235, %207 : vector<2x1xf32>
    %237 = vector.broadcast %236 : vector<2x1xf32> to vector<2x32xf32>
    %238 = arith.mulf %237, %162 : vector<2x32xf32>
    %239 = arith.addf %234, %238 : vector<2x32xf32>
    %c3_i32_62 = arith.constant 3 : i32
    %240 = arith.index_cast %c3_i32_62 : i32 to index
    %c0_63 = arith.constant 0 : index
    %c0_64 = arith.constant 0 : index
    %241 = vector.load %arg1[%240, %c0_63, %c0_64] : memref<4x2x128xf32, #tpu.memory_space<vmem>>, vector<1x2x128xf32>
    %242 = vector.shape_cast %241 : vector<1x2x128xf32> to vector<2x128xf32>
    %243 = arith.index_cast %c3_i32_62 : i32 to index
    %c0_65 = arith.constant 0 : index
    %c0_66 = arith.constant 0 : index
    %244 = vector.load %arg3[%243, %c0_65, %c0_66] : memref<4x2x1xf32, #tpu.memory_space<vmem>>, vector<1x2x1xf32>
    %245 = vector.shape_cast %244 : vector<1x2x1xf32> to vector<2x1xf32>
    %246 = arith.truncf %193 : vector<2x32xf32> to vector<2x32xbf16>
    %cst_67 = arith.constant dense<0.000000e+00> : vector<2x128xf32>
    %247 = tpu.matmul %246, %3, %cst_67 {dimension_numbers = #tpu.dot_dimension_numbers<[1], [0], [0], [1], [0, 0, 1, 1], [], []>} : vector<2x32xbf16>, vector<32x128xbf16>, vector<2x128xf32> -> vector<2x128xf32>
    %248 = arith.addf %242, %247 : vector<2x128xf32>
    %249 = arith.negf %248 : vector<2x128xf32>
    %250 = math.exp %249 : vector<2x128xf32>
    %cst_68 = arith.constant 1.000000e+00 : f32
    %251 = vector.broadcast %cst_68 : f32 to vector<2x128xf32>
    %252 = arith.addf %251, %250 : vector<2x128xf32>
    %253 = arith.divf %251, %252 : vector<2x128xf32>
    %254 = vector.extract_strided_slice %253 {offsets = [0, 0], sizes = [2, 32], strides = [1, 1]} : vector<2x128xf32> to vector<2x32xf32>
    %255 = vector.extract_strided_slice %253 {offsets = [0, 32], sizes = [2, 32], strides = [1, 1]} : vector<2x128xf32> to vector<2x32xf32>
    %256 = vector.extract_strided_slice %253 {offsets = [0, 96], sizes = [2, 32], strides = [1, 1]} : vector<2x128xf32> to vector<2x32xf32>
    %257 = vector.extract_strided_slice %248 {offsets = [0, 64], sizes = [2, 32], strides = [1, 1]} : vector<2x128xf32> to vector<2x32xf32>
    %258 = math.tanh %257 : vector<2x32xf32>
    %259 = arith.mulf %255, %200 : vector<2x32xf32>
    %260 = arith.mulf %254, %258 : vector<2x32xf32>
    %261 = arith.addf %259, %260 : vector<2x32xf32>
    %262 = math.tanh %261 : vector<2x32xf32>
    %263 = arith.mulf %256, %262 : vector<2x32xf32>
    %264 = vector.broadcast %245 : vector<2x1xf32> to vector<2x32xf32>
    %265 = arith.mulf %264, %263 : vector<2x32xf32>
    %cst_69 = arith.constant 1.000000e+00 : f32
    %266 = vector.broadcast %cst_69 : f32 to vector<2x1xf32>
    %267 = arith.subf %266, %245 : vector<2x1xf32>
    %268 = vector.broadcast %267 : vector<2x1xf32> to vector<2x32xf32>
    %269 = arith.mulf %268, %193 : vector<2x32xf32>
    %270 = arith.addf %265, %269 : vector<2x32xf32>
    %271 = vector.broadcast %245 : vector<2x1xf32> to vector<2x32xf32>
    %272 = arith.mulf %271, %261 : vector<2x32xf32>
    %cst_70 = arith.constant 1.000000e+00 : f32
    %273 = vector.broadcast %cst_70 : f32 to vector<2x1xf32>
    %274 = arith.subf %273, %245 : vector<2x1xf32>
    %275 = vector.broadcast %274 : vector<2x1xf32> to vector<2x32xf32>
    %276 = arith.mulf %275, %200 : vector<2x32xf32>
    %277 = arith.addf %272, %276 : vector<2x32xf32>
    %c3_i32_71 = arith.constant 3 : i32
    %278 = arith.subi %c3_i32_71, %c3_i32_62 : i32
    %279 = arith.index_cast %278 : i32 to index
    %c0_72 = arith.constant 0 : index
    %c0_73 = arith.constant 0 : index
    %280 = vector.load %arg2[%279, %c0_72, %c0_73] : memref<4x2x128xf32, #tpu.memory_space<vmem>>, vector<1x2x128xf32>
    %281 = vector.shape_cast %280 : vector<1x2x128xf32> to vector<2x128xf32>
    %282 = arith.index_cast %278 : i32 to index
    %c0_74 = arith.constant 0 : index
    %c0_75 = arith.constant 0 : index
    %283 = vector.load %arg4[%282, %c0_74, %c0_75] : memref<4x2x1xf32, #tpu.memory_space<vmem>>, vector<1x2x1xf32>
    %284 = vector.shape_cast %283 : vector<1x2x1xf32> to vector<2x1xf32>
    %285 = arith.truncf %232 : vector<2x32xf32> to vector<2x32xbf16>
    %cst_76 = arith.constant dense<0.000000e+00> : vector<2x128xf32>
    %286 = tpu.matmul %285, %4, %cst_76 {dimension_numbers = #tpu.dot_dimension_numbers<[1], [0], [0], [1], [0, 0, 1, 1], [], []>} : vector<2x32xbf16>, vector<32x128xbf16>, vector<2x128xf32> -> vector<2x128xf32>
    %287 = arith.addf %281, %286 : vector<2x128xf32>
    %288 = arith.negf %287 : vector<2x128xf32>
    %289 = math.exp %288 : vector<2x128xf32>
    %cst_77 = arith.constant 1.000000e+00 : f32
    %290 = vector.broadcast %cst_77 : f32 to vector<2x128xf32>
    %291 = arith.addf %290, %289 : vector<2x128xf32>
    %292 = arith.divf %290, %291 : vector<2x128xf32>
    %293 = vector.extract_strided_slice %292 {offsets = [0, 0], sizes = [2, 32], strides = [1, 1]} : vector<2x128xf32> to vector<2x32xf32>
    %294 = vector.extract_strided_slice %292 {offsets = [0, 32], sizes = [2, 32], strides = [1, 1]} : vector<2x128xf32> to vector<2x32xf32>
    %295 = vector.extract_strided_slice %292 {offsets = [0, 96], sizes = [2, 32], strides = [1, 1]} : vector<2x128xf32> to vector<2x32xf32>
    %296 = vector.extract_strided_slice %287 {offsets = [0, 64], sizes = [2, 32], strides = [1, 1]} : vector<2x128xf32> to vector<2x32xf32>
    %297 = math.tanh %296 : vector<2x32xf32>
    %298 = arith.mulf %294, %239 : vector<2x32xf32>
    %299 = arith.mulf %293, %297 : vector<2x32xf32>
    %300 = arith.addf %298, %299 : vector<2x32xf32>
    %301 = math.tanh %300 : vector<2x32xf32>
    %302 = arith.mulf %295, %301 : vector<2x32xf32>
    %303 = vector.broadcast %284 : vector<2x1xf32> to vector<2x32xf32>
    %304 = arith.mulf %303, %302 : vector<2x32xf32>
    %cst_78 = arith.constant 1.000000e+00 : f32
    %305 = vector.broadcast %cst_78 : f32 to vector<2x1xf32>
    %306 = arith.subf %305, %284 : vector<2x1xf32>
    %307 = vector.broadcast %306 : vector<2x1xf32> to vector<2x32xf32>
    %308 = arith.mulf %307, %232 : vector<2x32xf32>
    %309 = arith.addf %304, %308 : vector<2x32xf32>
    %310 = vector.broadcast %284 : vector<2x1xf32> to vector<2x32xf32>
    %311 = arith.mulf %310, %300 : vector<2x32xf32>
    %cst_79 = arith.constant 1.000000e+00 : f32
    %312 = vector.broadcast %cst_79 : f32 to vector<2x1xf32>
    %313 = arith.subf %312, %284 : vector<2x1xf32>
    %314 = vector.broadcast %313 : vector<2x1xf32> to vector<2x32xf32>
    %315 = arith.mulf %314, %239 : vector<2x32xf32>
    %316 = arith.addf %311, %315 : vector<2x32xf32>
    %c4_i32 = arith.constant 4 : i32
    %c0_80 = arith.constant 0 : index
    %c0_81 = arith.constant 0 : index
    %317 = vector.load %arg10[%c0_80, %c0_81] : memref<2x32xf32, #tpu.memory_space<vmem>>, vector<2x32xf32>
    tpu.vector_store %arg10[%c0_80, %c0_81], %270 {strides = array<i32>} : memref<2x32xf32, #tpu.memory_space<vmem>>, vector<2x32xf32>,
    %c0_82 = arith.constant 0 : index
    %c0_83 = arith.constant 0 : index
    %318 = vector.load %arg11[%c0_82, %c0_83] : memref<2x32xf32, #tpu.memory_space<vmem>>, vector<2x32xf32>
    tpu.vector_store %arg11[%c0_82, %c0_83], %277 {strides = array<i32>} : memref<2x32xf32, #tpu.memory_space<vmem>>, vector<2x32xf32>,
    %c0_84 = arith.constant 0 : index
    %c0_85 = arith.constant 0 : index
    %319 = vector.load %arg12[%c0_84, %c0_85] : memref<2x32xf32, #tpu.memory_space<vmem>>, vector<2x32xf32>
    tpu.vector_store %arg12[%c0_84, %c0_85], %309 {strides = array<i32>} : memref<2x32xf32, #tpu.memory_space<vmem>>, vector<2x32xf32>,
    %c0_86 = arith.constant 0 : index
    %c0_87 = arith.constant 0 : index
    %320 = vector.load %arg13[%c0_86, %c0_87] : memref<2x32xf32, #tpu.memory_space<vmem>>, vector<2x32xf32>
    tpu.vector_store %arg13[%c0_86, %c0_87], %316 {strides = array<i32>} : memref<2x32xf32, #tpu.memory_space<vmem>>, vector<2x32xf32>,
    %c1_i32_88 = arith.constant 1 : i32
    %321 = arith.cmpi eq, %arg0, %c1_i32_88 : i32
    %322 = arith.extui %321 : i1 to i32
    %c0_i32_89 = arith.constant 0 : i32
    %323 = arith.cmpi ne, %322, %c0_i32_89 : i32
    scf.if %323 {
      %324 = arith.truncf %270 : vector<2x32xf32> to vector<2x32xbf16>
      %c0_90 = arith.constant 0 : index
      %c0_91 = arith.constant 0 : index
      %325 = vector.load %arg7[%c0_90, %c0_91] : memref<64x128xbf16, #tpu.memory_space<vmem>>, vector<32x128xbf16>
      %cst_92 = arith.constant dense<0.000000e+00> : vector<2x128xf32>
      %326 = tpu.matmul %324, %325, %cst_92 {dimension_numbers = #tpu.dot_dimension_numbers<[1], [0], [0], [1], [0, 0, 1, 1], [], []>} : vector<2x32xbf16>, vector<32x128xbf16>, vector<2x128xf32> -> vector<2x128xf32>
      %327 = arith.truncf %309 : vector<2x32xf32> to vector<2x32xbf16>
      %c32 = arith.constant 32 : index
      %c0_93 = arith.constant 0 : index
      %328 = vector.load %arg7[%c32, %c0_93] : memref<64x128xbf16, #tpu.memory_space<vmem>>, vector<32x128xbf16>
      %cst_94 = arith.constant dense<0.000000e+00> : vector<2x128xf32>
      %329 = tpu.matmul %327, %328, %cst_94 {dimension_numbers = #tpu.dot_dimension_numbers<[1], [0], [0], [1], [0, 0, 1, 1], [], []>} : vector<2x32xbf16>, vector<32x128xbf16>, vector<2x128xf32> -> vector<2x128xf32>
      %330 = arith.addf %326, %329 : vector<2x128xf32>
      %c0_95 = arith.constant 0 : index
      %c0_96 = arith.constant 0 : index
      %331 = vector.load %arg8[%c0_95, %c0_96] : memref<1x128xf32, #tpu.memory_space<vmem>>, vector<1x128xf32>
      %332 = vector.broadcast %331 : vector<1x128xf32> to vector<2x128xf32>
      %333 = arith.addf %330, %332 : vector<2x128xf32>
      %c0_97 = arith.constant 0 : index
      %c0_98 = arith.constant 0 : index
      %334 = vector.load %arg9[%c0_97, %c0_98] : memref<2x128xf32, #tpu.memory_space<vmem>>, vector<2x128xf32>
      tpu.vector_store %arg9[%c0_97, %c0_98], %333 {strides = array<i32>} : memref<2x128xf32, #tpu.memory_space<vmem>>, vector<2x128xf32>,
    } else {
    }
    return
  }
  func.func @transform_0(%arg0: i32) -> (i32, i32, i32) {
    %c0_i32 = arith.constant 0 : i32
    %c0_i32_0 = arith.constant 0 : i32
    %c0_i32_1 = arith.constant 0 : i32
    return %arg0, %c0_i32, %c0_i32_0 : i32, i32, i32
  }
  func.func @transform_1(%arg0: i32) -> (i32, i32, i32) {
    %c1_i32 = arith.constant 1 : i32
    %0 = arith.subi %c1_i32, %arg0 : i32
    %c0_i32 = arith.constant 0 : i32
    %c1_i32_0 = arith.constant 1 : i32
    %c0_i32_1 = arith.constant 0 : i32
    return %0, %c0_i32, %c1_i32_0 : i32, i32, i32
  }
  func.func @transform_2(%arg0: i32) -> (i32, i32, i32) {
    %c0_i32 = arith.constant 0 : i32
    %c0_i32_0 = arith.constant 0 : i32
    %c0_i32_1 = arith.constant 0 : i32
    return %arg0, %c0_i32, %c0_i32_0 : i32, i32, i32
  }
  func.func @transform_3(%arg0: i32) -> (i32, i32, i32) {
    %c1_i32 = arith.constant 1 : i32
    %0 = arith.subi %c1_i32, %arg0 : i32
    %c0_i32 = arith.constant 0 : i32
    %c0_i32_0 = arith.constant 0 : i32
    %c0_i32_1 = arith.constant 0 : i32
    return %0, %c0_i32, %c0_i32_0 : i32, i32, i32
  }
  func.func @transform_4(%arg0: i32) -> (i32, i32) {
    %c0_i32 = arith.constant 0 : i32
    %c0_i32_0 = arith.constant 0 : i32
    %c0_i32_1 = arith.constant 0 : i32
    return %c0_i32, %c0_i32_0 : i32, i32
  }
  func.func @transform_5(%arg0: i32) -> (i32, i32) {
    %c0_i32 = arith.constant 0 : i32
    %c0_i32_0 = arith.constant 0 : i32
    %c0_i32_1 = arith.constant 0 : i32
    return %c0_i32, %c0_i32_0 : i32, i32
  }
  func.func @transform_6(%arg0: i32) -> (i32, i32) {
    %c0_i32 = arith.constant 0 : i32
    %c0_i32_0 = arith.constant 0 : i32
    %c0_i32_1 = arith.constant 0 : i32
    return %c0_i32, %c0_i32_0 : i32, i32
  }
  func.func @transform_7(%arg0: i32) -> (i32, i32) {
    %c0_i32 = arith.constant 0 : i32
    %c0_i32_0 = arith.constant 0 : i32
    %c0_i32_1 = arith.constant 0 : i32
    return %c0_i32, %c0_i32_0 : i32, i32
  }
  func.func @transform_8(%arg0: i32) -> (i32, i32) {
    %c0_i32 = arith.constant 0 : i32
    %c0_i32_0 = arith.constant 0 : i32
    %c0_i32_1 = arith.constant 0 : i32
    return %c0_i32, %c0_i32_0 : i32, i32
  }
}

</mosaic_0001>

<llo_original>
// kernel: custom_bert2lstm_forward.2
$region0: #{custom_bert2lstm_forward.2}
  #allocation0 [shape = 'u32[]', space=smem, size = 0x4, offset = 0x4, fixed_abs, tag = 'smem constant byte address 0x4 - core index']
  #allocation1 [shape = 'u32[144,128]{1,0:T(1,128)}', space=vmem, size = 0x12000, scoped, tag = 'internal scratch']
  %s0 = inlined_call_operand.vmem [shape: bf16[16,32], index: 0, kind: input, shape index: {}]
  %s1 = inlined_call_operand.vmem [shape: bf16[32,256], index: 1, kind: input, shape index: {}]
  %s2 = inlined_call_operand.vmem [shape: f32[1,256], index: 2, kind: input, shape index: {}]
  %s3 = inlined_call_operand.vmem [shape: f32[16,256], index: 3, kind: output, shape index: {}]
  %s4 = sld [smem:[#allocation0]]
  $region45: #{custom_bert2lstm_forward.2} parent=0
    _
  %s6 = ssub.s32 1, %s4
  %s7 = scalar_select 0, %s6, %s4
  loop: start=0, step=1, limit=4
  $region2: #{custom_bert2lstm_forward.2} parent=0 // loop_pre_header
    _
  $region3: #{custom_bert2lstm_forward.2} parent=0 // loop_header
    %s9 = sphi 0, %s13
    %p10 = scmp.ge.s32.totalorder %s9, 4
    %s19 = sphi 0, %s21
    %s22 = sphi 0, %s19
    %s23 = sphi 0, %s22
    %s39 = sphi 0, %s23
    %s43 = sphi 0, %s43
    %s45 = sphi 0, %s43
    %s46 = sphi 0, %s45
    %s60 = sphi 0, %s46
    %s64 = sphi 0, %s64
    %s66 = sphi 0, %s64
    %s67 = sphi 0, %s66
    %s81 = sphi 0, %s67
    %s87 = sphi 0, %s89
    %s90 = sphi 0, %s87
    %s91 = sphi 0, %s90
    %s107 = sphi 0, %s91
  $region4: #{custom_bert2lstm_forward.2} parent=0 // loop_header_branch
    %12 = sbr.rel (%p10) target = $region8
  $region5: #{custom_bert2lstm_forward.2} parent=0 // loop_body
    %s14 = ssub.s32 %s9, 1
    %s15 = ssub.s32 %s9, 2
    %s16 = sadd.s32 %s9, 1
    %s17 = ssub.s32 %s9, %s16
    %p18 = scmp.eq.s32.totalorder %s17, 0
    %s20 = sadd.s32 %s19, 1
    %s21 = scalar_select %p18, %s19, %s20
    %p24 = pneg %p18
    %p25 = scmp.eq.s32.totalorder %s9, 1
    %p26 = por %p24, %p25
    %p27 = scmp.ne.s32.totalorder %s19, %s22
    %p28 = scmp.eq.s32.totalorder %s9, 0
    %p29 = por %p27, %p28
    %p30 = scmp.ne.s32.totalorder %s19, %s22
    %p31 = scmp.eq.s32.totalorder %s14, 1
    %p32 = por %p30, %p31
    %p33 = scmp.ne.s32.totalorder %s22, %s23
    %p34 = scmp.eq.s32.totalorder %s14, 0
    %p35 = por %p33, %p34
    %p36 = scmp.ne.s32.totalorder %s22, %s23
    %p37 = scmp.eq.s32.totalorder %s15, 1
    %p38 = por %p36, %p37
    %p40 = scmp.ne.s32.totalorder %s23, %s39
    %p41 = scmp.eq.s32.totalorder %s15, 0
    %p42 = por %p40, %p41
    %s44 = sadd.s32 %s43, 1
    %p47 = scmp.eq.s32.totalorder %s9, 1
    %p48 = scmp.ne.s32.totalorder %s43, %s45
    %p49 = scmp.eq.s32.totalorder %s9, 0
    %p50 = por %p48, %p49
    %p51 = scmp.ne.s32.totalorder %s43, %s45
    %p52 = scmp.eq.s32.totalorder %s14, 1
    %p53 = por %p51, %p52
    %p54 = scmp.ne.s32.totalorder %s45, %s46
    %p55 = scmp.eq.s32.totalorder %s14, 0
    %p56 = por %p54, %p55
    %p57 = scmp.ne.s32.totalorder %s45, %s46
    %p58 = scmp.eq.s32.totalorder %s15, 1
    %p59 = por %p57, %p58
    %p61 = scmp.ne.s32.totalorder %s46, %s60
    %p62 = scmp.eq.s32.totalorder %s15, 0
    %p63 = por %p61, %p62
    %s65 = sadd.s32 %s64, 1
    %p68 = scmp.eq.s32.totalorder %s9, 1
    %p69 = scmp.ne.s32.totalorder %s64, %s66
    %p70 = scmp.eq.s32.totalorder %s9, 0
    %p71 = por %p69, %p70
    %p72 = scmp.ne.s32.totalorder %s64, %s66
    %p73 = scmp.eq.s32.totalorder %s14, 1
    %p74 = por %p72, %p73
    %p75 = scmp.ne.s32.totalorder %s66, %s67
    %p76 = scmp.eq.s32.totalorder %s14, 0
    %p77 = por %p75, %p76
    %p78 = scmp.ne.s32.totalorder %s66, %s67
    %p79 = scmp.eq.s32.totalorder %s15, 1
    %p80 = por %p78, %p79
    %p82 = scmp.ne.s32.totalorder %s67, %s81
    %p83 = scmp.eq.s32.totalorder %s15, 0
    %p84 = por %p82, %p83
    %s85 = ssub.s32 %s9, %s16
    %p86 = scmp.eq.s32.totalorder %s85, 0
    %s88 = sadd.s32 %s87, 1
    %s89 = scalar_select %p86, %s87, %s88
    %p92 = pneg %p86
    %p93 = scmp.eq.s32.totalorder %s9, 1
    %p94 = por %p92, %p93
    %p95 = scmp.ne.s32.totalorder %s87, %s90
    %p96 = scmp.eq.s32.totalorder %s9, 0
    %p97 = por %p95, %p96
    %p98 = scmp.ne.s32.totalorder %s87, %s90
    %p99 = scmp.eq.s32.totalorder %s14, 1
    %p100 = por %p98, %p99
    %p101 = scmp.ne.s32.totalorder %s90, %s91
    %p102 = scmp.eq.s32.totalorder %s14, 0
    %p103 = por %p101, %p102
    %p104 = scmp.ne.s32.totalorder %s90, %s91
    %p105 = scmp.eq.s32.totalorder %s15, 1
    %p106 = por %p104, %p105
    %p108 = scmp.ne.s32.totalorder %s91, %s107
    %p109 = scmp.eq.s32.totalorder %s15, 0
    %p110 = por %p108, %p109
    %p111 = scmp.le.s32.totalorder 1, %s9
    %p112 = scmp.lt.s32.totalorder %s9, 3
    %p113 = pnand %p111, %p112
    %p114 = pneg %p113
    // Predicated region
    $region9: #{custom_bert2lstm_forward.2} parent=5 // pred_check
      _
    $region10: #{custom_bert2lstm_forward.2} parent=5 // pred_check_branch
      %116 = sbr.rel (%p113) target = $region12
    $region11: #{custom_bert2lstm_forward.2} parent=5 // pred_region
      %s117 = ssub.s32 %s9, 1
      // Predicated region
      $region13: #{custom_bert2lstm_forward.2} parent=11 // pred_check
        %p118 = pneg %p56
      $region14: #{custom_bert2lstm_forward.2} parent=11 // pred_check_branch
        %120 = sbr.rel (%p118) target = $region16
      $region15: #{custom_bert2lstm_forward.2} parent=11 // pred_region
        _
      $region16: #{custom_bert2lstm_forward.2} parent=11 // pred_fallthru
        _
      // Predicated region
      $region17: #{custom_bert2lstm_forward.2} parent=11 // pred_check
        %p121 = pneg %p77
      $region18: #{custom_bert2lstm_forward.2} parent=11 // pred_check_branch
        %123 = sbr.rel (%p121) target = $region20
      $region19: #{custom_bert2lstm_forward.2} parent=11 // pred_region
        _
      $region20: #{custom_bert2lstm_forward.2} parent=11 // pred_fallthru
        _
    $region12: #{custom_bert2lstm_forward.2} parent=5 // pred_fallthru
      _
    %p124 = scmp.lt.s32.totalorder %s9, 2
    // Predicated region
    $region21: #{custom_bert2lstm_forward.2} parent=5 // pred_check
      %p125 = pneg %p124
    $region22: #{custom_bert2lstm_forward.2} parent=5 // pred_check_branch
      %127 = sbr.rel (%p125) target = $region24
    $region23: #{custom_bert2lstm_forward.2} parent=5 // pred_region
      // Predicated region
      $region25: #{custom_bert2lstm_forward.2} parent=23 // pred_check
        %p128 = pneg %p29
      $region26: #{custom_bert2lstm_forward.2} parent=23 // pred_check_branch
        %130 = sbr.rel (%p128) target = $region28
      $region27: #{custom_bert2lstm_forward.2} parent=23 // pred_region
        %p131 = scmp.lt.s32.totalorder %s9, 1
        %s132 = scalar_select %p131, %s9, 1
        %s133 = smul.addr %s132, 4
        %s134 = scalar_lea.vmem %s0, %s133
      $region28: #{custom_bert2lstm_forward.2} parent=23 // pred_fallthru
        _
    $region24: #{custom_bert2lstm_forward.2} parent=5 // pred_fallthru
      _
    %p135 = scmp.le.s32.totalorder 1, %s9
    %p136 = scmp.lt.s32.totalorder %s9, 3
    %p137 = pnand %p135, %p136
    %p138 = pneg %p137
    // Predicated region
    $region29: #{custom_bert2lstm_forward.2} parent=5 // pred_check
      _
    $region30: #{custom_bert2lstm_forward.2} parent=5 // pred_check_branch
      %140 = sbr.rel (%p137) target = $region32
    $region31: #{custom_bert2lstm_forward.2} parent=5 // pred_region
      %s141 = ssub.s32 %s9, 1
      %p142 = scmp.lt.s32.totalorder %s14, 1
      %s143 = scalar_select %p142, %s14, 1
      %s144 = smul.addr %s143, 4
      %s145 = scalar_lea.vmem %s0, %s144
      %p146 = pneg %p35
      %p147 = pneg %p32
      %p148 = pneg %p56
      %p149 = pneg %p53
      %p150 = pneg %p77
      %p151 = pneg %p74
      %p152 = pneg %p103
      %p153 = pneg %p100
      %p154 = scmp.lt.s32.totalorder %s14, 1
      %s155 = scalar_select %p154, %s14, 1
      %s156 = smul.addr %s155, 2
      %s157 = smul.addr %s156, 8
      %s158 = scalar_lea.vmem %s3, %s157
      %p159 = scmp.lt.s32.totalorder %s14, 1
      %s160 = scalar_select %p159, %s14, 1
      %s161 = smul.addr %s160, 4
      %s162 = scalar_lea.vmem %s0, %s161
      %p163 = scmp.lt.s32.totalorder %s14, 1
      %s164 = scalar_select %p163, %s14, 1
      %s165 = smul.addr %s164, 2
      %s166 = smul.addr %s165, 8
      %s167 = scalar_lea.vmem %s3, %s166
      %v169 = vld [vmem:[%s162] sm:$0xf]
      %v170 = vld [vmem:[%s1] sm:$0xff]
      %v171 = vld [vmem:[%s1 + $0x8] sm:$0xff]
      %v172 = vld [vmem:[%s1 + $0x10] sm:$0xff]
      %v173 = vld [vmem:[%s1 + $0x18] sm:$0xff]
      %v174 = vld [vmem:[%s2] sm:$0x3]
      %v176 = vlaneseq
      %v177 = vshrl.u32 %v176, 7
      %v178 = vsub.s32 0, %v177
      %v179 = vrot.slane %v174, %v178
      %v180 = vlaneseq
      %v181 = vshrl.u32 %v180, 7
      %v182 = vsub.s32 1, %v181
      %v183 = vrot.slane %v174, %v182
      %v190 = vunpack.c.l.b16 %v170
      %v191 = vunpack.c.h.b16 %v170
      %v192 = vunpack.c.l.b16 %v171
      %v193 = vunpack.c.h.b16 %v171
      %v194 = vunpack.c.l.b16 %v172
      %v195 = vunpack.c.h.b16 %v172
      %v196 = vunpack.c.l.b16 %v173
      %v197 = vunpack.c.h.b16 %v173
      %v198 = vpack.c.b16 %v192, %v190
      %v199 = vpack.c.b16 %v193, %v191
      %v200 = vpack.c.b16 %v196, %v194
      %v201 = vpack.c.b16 %v197, %v195
      %vm206 = vcmask 261120
      %v208 = vsel %vm206, %v169, 0
      %210 = vmatprep.subr.bf16.mxu0 %v199
      %211 = vmatpush1.bf16.msra.mxu0 %v198
      %212 = vmatprep.subr.bf16.mxu0 %v201
      %213 = vmatpush1.bf16.msra.mxu0 %v200
      %214 = vmatprep.subr.bf16.mxu0 0
      %215 = vmatpush1.bf16.msra.mxu0 0
      %216 = vmatprep.subr.bf16.mxu0 0
      %217 = vmatpush1.bf16.msra.mxu0 0
      %218 = vmatprep.subr.bf16.mxu0 0
      %219 = vmatpush1.bf16.msra.mxu0 0
      %220 = vmatprep.subr.bf16.mxu0 0
      %221 = vmatpush1.bf16.msra.mxu0 0
      %222 = vmatprep.subr.bf16.mxu0 0
      %223 = vmatpush1.bf16.msra.mxu0 0
      %224 = vmatprep.subr.bf16.mxu0 0
      %225 = vmatpush1.bf16.msra.mxu0 0
      %226 = vmatprep.subr.bf16.mxu0 0
      %227 = vmatpush1.bf16.msra.mxu0 0
      %228 = vmatprep.subr.bf16.mxu0 0
      %229 = vmatpush1.bf16.msra.mxu0 0
      %230 = vmatprep.subr.bf16.mxu0 0
      %231 = vmatpush1.bf16.msra.mxu0 0
      %232 = vmatprep.subr.bf16.mxu0 0
      %233 = vmatpush1.bf16.msra.mxu0 0
      %234 = vmatprep.subr.bf16.mxu0 0
      %235 = vmatpush1.bf16.msra.mxu0 0
      %236 = vmatprep.subr.bf16.mxu0 0
      %237 = vmatpush1.bf16.msra.mxu0 0
      %238 = vmatprep.subr.bf16.mxu0 0
      %239 = vmatpush1.bf16.msra.mxu0 0
      %240 = vmatprep.subr.bf16.mxu0 0
      %241 = vmatpush1.bf16.msra.mxu0 0
      %242 = vmatprep.mubr.bf16.mxu0 0
      %243 = vmatmul.mubr.bf16.gmra.mrb[0].mxu0 %v208
      %v244 = vpop.f32.mrb[0].mxu0
      %v245 = vadd.f32 %v179, %v244
      %v246 = vpop.f32.mrb[0].mxu0
      %v247 = vadd.f32 %v183, %v246
      %v248 = vpop.f32.mrb[0].mxu0
      %v249 = vpop.f32.mrb[0].mxu0
      %250 = vdwg.mxu0
      %251 = vst [vmem:[%s167] sm:$0xff] %v245
      %252 = vst [vmem:[%s167 + $0x8] sm:$0xff] %v247
      %p253 = scmp.lt.s32.totalorder %s14, 1
      %s254 = scalar_select %p253, %s14, 1
      %s255 = smul.addr %s254, 2
      %s256 = smul.addr %s255, 8
      %s257 = scalar_lea.vmem %s3, %s256
      // Predicated region
      $region33: #{custom_bert2lstm_forward.2} parent=31 // pred_check
        %p258 = pneg %p100
      $region34: #{custom_bert2lstm_forward.2} parent=31 // pred_check_branch
        %260 = sbr.rel (%p258) target = $region36
      $region35: #{custom_bert2lstm_forward.2} parent=31 // pred_region
        _
      $region36: #{custom_bert2lstm_forward.2} parent=31 // pred_fallthru
        _
    $region32: #{custom_bert2lstm_forward.2} parent=5 // pred_fallthru
      _
    %p261 = scmp.le.s32.totalorder 2, %s9
    // Predicated region
    $region37: #{custom_bert2lstm_forward.2} parent=5 // pred_check
      %p262 = pneg %p261
    $region38: #{custom_bert2lstm_forward.2} parent=5 // pred_check_branch
      %264 = sbr.rel (%p262) target = $region40
    $region39: #{custom_bert2lstm_forward.2} parent=5 // pred_region
      %s265 = ssub.s32 %s9, 2
      // Predicated region
      $region41: #{custom_bert2lstm_forward.2} parent=39 // pred_check
        %p266 = pneg %p106
      $region42: #{custom_bert2lstm_forward.2} parent=39 // pred_check_branch
        %268 = sbr.rel (%p266) target = $region44
      $region43: #{custom_bert2lstm_forward.2} parent=39 // pred_region
        %p269 = scmp.lt.s32.totalorder %s15, 1
        %s270 = scalar_select %p269, %s15, 1
        %s271 = smul.addr %s270, 2
        %s272 = smul.addr %s271, 8
        %s273 = scalar_lea.vmem %s3, %s272
      $region44: #{custom_bert2lstm_forward.2} parent=39 // pred_fallthru
        _
    $region40: #{custom_bert2lstm_forward.2} parent=5 // pred_fallthru
      _
  $region6: #{custom_bert2lstm_forward.2} parent=0 // loop_footer
    %s13 = sadd.s32 1, %s9
  $region7: #{custom_bert2lstm_forward.2} parent=0 // loop_footer_branch
    %8 = sbr.rel target = $region3
  $region8: #{custom_bert2lstm_forward.2} parent=0 // loop_exit
    _

// kernel: custom_bert2lstm_forward.3
$region0: #{custom_bert2lstm_forward.3}
  #allocation0 [shape = 'u32[]', space=smem, size = 0x4, offset = 0x4, fixed_abs, tag = 'smem constant byte address 0x4 - core index']
  #allocation1 [shape = 'u32[144,128]{1,0:T(1,128)}', space=vmem, size = 0x12000, scoped, tag = 'internal scratch']
  #allocation2 [shape = 'f32[2,32]{1,0:T(2,128)}', space=vmem, size = 0x400, scoped, tag = 'scratch operand']
  #allocation3 [shape = 'f32[2,32]{1,0:T(2,128)}', space=vmem, size = 0x400, scoped, tag = 'scratch operand']
  #allocation4 [shape = 'f32[2,32]{1,0:T(2,128)}', space=vmem, size = 0x400, scoped, tag = 'scratch operand']
  #allocation5 [shape = 'f32[2,32]{1,0:T(2,128)}', space=vmem, size = 0x400, scoped, tag = 'scratch operand']
  %s0 = inlined_call_operand.vmem [shape: f32[8,2,256], index: 0, kind: input, shape index: {}, may-alias: {0,1}]
  %s1 = inlined_call_operand.vmem [shape: f32[8,2,256], index: 1, kind: input, shape index: {}, may-alias: {0,1}]
  %s2 = inlined_call_operand.vmem [shape: f32[8,2,1], index: 2, kind: input, shape index: {}, may-alias: {2,3}]
  %s3 = inlined_call_operand.vmem [shape: f32[8,2,1], index: 3, kind: input, shape index: {}, may-alias: {2,3}]
  %s4 = inlined_call_operand.vmem [shape: bf16[32,128], index: 4, kind: input, shape index: {}]
  %s5 = inlined_call_operand.vmem [shape: bf16[32,128], index: 5, kind: input, shape index: {}]
  %s6 = inlined_call_operand.vmem [shape: bf16[64,128], index: 6, kind: input, shape index: {}]
  %s7 = inlined_call_operand.vmem [shape: f32[1,128], index: 7, kind: input, shape index: {}]
  %s8 = inlined_call_operand.hbm [shape: f32[2,128], index: 8, kind: output, shape index: {}]
  %s9 = sld [smem:[#allocation0]]
  $region155: #{custom_bert2lstm_forward.3} parent=0
    _
  %s11 = ssub.s32 1, %s9
  %s12 = scalar_select 0, %s11, %s9
  $region1: #{custom_bert2lstm_forward.3} parent=0
    #allocation6 [shape = 'u8[8192]{0}', space=vmem, size = 0x2000, scoped, tag = 'input window, operand 0']
    #allocation7 [shape = 'u8[8192]{0}', space=vmem, size = 0x2000, scoped, tag = 'input window, operand 1']
    #allocation8 [shape = 'u8[1024]{0}', space=vmem, size = 0x400, scoped, tag = 'output window, operand 0, single buffered']
    #allocation9 [shape = 's32[2]{0}', space=sflag, size = 0x8, scoped, tag = 'scoped memory for custom_bert2lstm_forward.3']
    %13 = vsyncpa [#allocation9], 0
    loop: start=0, step=1, limit=4
    $region2: #{custom_bert2lstm_forward.3} parent=1 // loop_pre_header
      _
    $region3: #{custom_bert2lstm_forward.3} parent=1 // loop_header
      %s15 = sphi 0, %s19
      %p16 = scmp.ge.s32.totalorder %s15, 4
      %s25 = sphi 0, %s27
      %s28 = sphi 0, %s25
      %s29 = sphi 0, %s28
      %s45 = sphi 0, %s29
      %s53 = sphi 0, %s55
      %s56 = sphi 0, %s53
      %s57 = sphi 0, %s56
      %s73 = sphi 0, %s57
      %s79 = sphi 0, %s81
      %s82 = sphi 0, %s79
      %s83 = sphi 0, %s82
      %s99 = sphi 0, %s83
      %s107 = sphi 0, %s109
      %s110 = sphi 0, %s107
      %s111 = sphi 0, %s110
      %s127 = sphi 0, %s111
      %s131 = sphi 0, %s131
      %s133 = sphi 0, %s131
      %s134 = sphi 0, %s133
      %s148 = sphi 0, %s134
      %s152 = sphi 0, %s152
      %s154 = sphi 0, %s152
      %s155 = sphi 0, %s154
      %s169 = sphi 0, %s155
      %s173 = sphi 0, %s173
      %s175 = sphi 0, %s173
      %s176 = sphi 0, %s175
      %s190 = sphi 0, %s176
      %s194 = sphi 0, %s194
      %s196 = sphi 0, %s194
      %s197 = sphi 0, %s196
      %s211 = sphi 0, %s197
      %s215 = sphi 0, %s215
      %s217 = sphi 0, %s215
      %s218 = sphi 0, %s217
      %s232 = sphi 0, %s218
    $region4: #{custom_bert2lstm_forward.3} parent=1 // loop_header_branch
      %18 = sbr.rel (%p16) target = $region8
    $region5: #{custom_bert2lstm_forward.3} parent=1 // loop_body
      %s20 = ssub.s32 %s15, 1
      %s21 = ssub.s32 %s15, 2
      %s22 = sadd.s32 %s15, 1
      %s23 = ssub.s32 %s15, %s22
      %p24 = scmp.eq.s32.totalorder %s23, 0
      %s26 = sadd.s32 %s25, 1
      %s27 = scalar_select %p24, %s25, %s26
      %p30 = pneg %p24
      %p31 = scmp.eq.s32.totalorder %s15, 1
      %p32 = por %p30, %p31
      %p33 = scmp.ne.s32.totalorder %s25, %s28
      %p34 = scmp.eq.s32.totalorder %s15, 0
      %p35 = por %p33, %p34
      %p36 = scmp.ne.s32.totalorder %s25, %s28
      %p37 = scmp.eq.s32.totalorder %s20, 1
      %p38 = por %p36, %p37
      %p39 = scmp.ne.s32.totalorder %s28, %s29
      %p40 = scmp.eq.s32.totalorder %s20, 0
      %p41 = por %p39, %p40
      %p42 = scmp.ne.s32.totalorder %s28, %s29
      %p43 = scmp.eq.s32.totalorder %s21, 1
      %p44 = por %p42, %p43
      %p46 = scmp.ne.s32.totalorder %s29, %s45
      %p47 = scmp.eq.s32.totalorder %s21, 0
      %p48 = por %p46, %p47
      %s49 = ssub.s32 1, %s15
      %s50 = ssub.s32 1, %s22
      %s51 = ssub.s32 %s49, %s50
      %p52 = scmp.eq.s32.totalorder %s51, 0
      %s54 = sadd.s32 %s53, 1
      %s55 = scalar_select %p52, %s53, %s54
      %p58 = pneg %p52
      %p59 = scmp.eq.s32.totalorder %s15, 1
      %p60 = por %p58, %p59
      %p61 = scmp.ne.s32.totalorder %s53, %s56
      %p62 = scmp.eq.s32.totalorder %s15, 0
      %p63 = por %p61, %p62
      %p64 = scmp.ne.s32.totalorder %s53, %s56
      %p65 = scmp.eq.s32.totalorder %s20, 1
      %p66 = por %p64, %p65
      %p67 = scmp.ne.s32.totalorder %s56, %s57
      %p68 = scmp.eq.s32.totalorder %s20, 0
      %p69 = por %p67, %p68
      %p70 = scmp.ne.s32.totalorder %s56, %s57
      %p71 = scmp.eq.s32.totalorder %s21, 1
      %p72 = por %p70, %p71
      %p74 = scmp.ne.s32.totalorder %s57, %s73
      %p75 = scmp.eq.s32.totalorder %s21, 0
      %p76 = por %p74, %p75
      %s77 = ssub.s32 %s15, %s22
      %p78 = scmp.eq.s32.totalorder %s77, 0
      %s80 = sadd.s32 %s79, 1
      %s81 = scalar_select %p78, %s79, %s80
      %p84 = pneg %p78
      %p85 = scmp.eq.s32.totalorder %s15, 1
      %p86 = por %p84, %p85
      %p87 = scmp.ne.s32.totalorder %s79, %s82
      %p88 = scmp.eq.s32.totalorder %s15, 0
      %p89 = por %p87, %p88
      %p90 = scmp.ne.s32.totalorder %s79, %s82
      %p91 = scmp.eq.s32.totalorder %s20, 1
      %p92 = por %p90, %p91
      %p93 = scmp.ne.s32.totalorder %s82, %s83
      %p94 = scmp.eq.s32.totalorder %s20, 0
      %p95 = por %p93, %p94
      %p96 = scmp.ne.s32.totalorder %s82, %s83
      %p97 = scmp.eq.s32.totalorder %s21, 1
      %p98 = por %p96, %p97
      %p100 = scmp.ne.s32.totalorder %s83, %s99
      %p101 = scmp.eq.s32.totalorder %s21, 0
      %p102 = por %p100, %p101
      %s103 = ssub.s32 1, %s15
      %s104 = ssub.s32 1, %s22
      %s105 = ssub.s32 %s103, %s104
      %p106 = scmp.eq.s32.totalorder %s105, 0
      %s108 = sadd.s32 %s107, 1
      %s109 = scalar_select %p106, %s107, %s108
      %p112 = pneg %p106
      %p113 = scmp.eq.s32.totalorder %s15, 1
      %p114 = por %p112, %p113
      %p115 = scmp.ne.s32.totalorder %s107, %s110
      %p116 = scmp.eq.s32.totalorder %s15, 0
      %p117 = por %p115, %p116
      %p118 = scmp.ne.s32.totalorder %s107, %s110
      %p119 = scmp.eq.s32.totalorder %s20, 1
      %p120 = por %p118, %p119
      %p121 = scmp.ne.s32.totalorder %s110, %s111
      %p122 = scmp.eq.s32.totalorder %s20, 0
      %p123 = por %p121, %p122
      %p124 = scmp.ne.s32.totalorder %s110, %s111
      %p125 = scmp.eq.s32.totalorder %s21, 1
      %p126 = por %p124, %p125
      %p128 = scmp.ne.s32.totalorder %s111, %s127
      %p129 = scmp.eq.s32.totalorder %s21, 0
      %p130 = por %p128, %p129
      %s132 = sadd.s32 %s131, 1
      %p135 = scmp.eq.s32.totalorder %s15, 1
      %p136 = scmp.ne.s32.totalorder %s131, %s133
      %p137 = scmp.eq.s32.totalorder %s15, 0
      %p138 = por %p136, %p137
      %p139 = scmp.ne.s32.totalorder %s131, %s133
      %p140 = scmp.eq.s32.totalorder %s20, 1
      %p141 = por %p139, %p140
      %p142 = scmp.ne.s32.totalorder %s133, %s134
      %p143 = scmp.eq.s32.totalorder %s20, 0
      %p144 = por %p142, %p143
      %p145 = scmp.ne.s32.totalorder %s133, %s134
      %p146 = scmp.eq.s32.totalorder %s21, 1
      %p147 = por %p145, %p146
      %p149 = scmp.ne.s32.totalorder %s134, %s148
      %p150 = scmp.eq.s32.totalorder %s21, 0
      %p151 = por %p149, %p150
      %s153 = sadd.s32 %s152, 1
      %p156 = scmp.eq.s32.totalorder %s15, 1
      %p157 = scmp.ne.s32.totalorder %s152, %s154
      %p158 = scmp.eq.s32.totalorder %s15, 0
      %p159 = por %p157, %p158
      %p160 = scmp.ne.s32.totalorder %s152, %s154
      %p161 = scmp.eq.s32.totalorder %s20, 1
      %p162 = por %p160, %p161
      %p163 = scmp.ne.s32.totalorder %s154, %s155
      %p164 = scmp.eq.s32.totalorder %s20, 0
      %p165 = por %p163, %p164
      %p166 = scmp.ne.s32.totalorder %s154, %s155
      %p167 = scmp.eq.s32.totalorder %s21, 1
      %p168 = por %p166, %p167
      %p170 = scmp.ne.s32.totalorder %s155, %s169
      %p171 = scmp.eq.s32.totalorder %s21, 0
      %p172 = por %p170, %p171
      %s174 = sadd.s32 %s173, 1
      %p177 = scmp.eq.s32.totalorder %s15, 1
      %p178 = scmp.ne.s32.totalorder %s173, %s175
      %p179 = scmp.eq.s32.totalorder %s15, 0
      %p180 = por %p178, %p179
      %p181 = scmp.ne.s32.totalorder %s173, %s175
      %p182 = scmp.eq.s32.totalorder %s20, 1
      %p183 = por %p181, %p182
      %p184 = scmp.ne.s32.totalorder %s175, %s176
      %p185 = scmp.eq.s32.totalorder %s20, 0
      %p186 = por %p184, %p185
      %p187 = scmp.ne.s32.totalorder %s175, %s176
      %p188 = scmp.eq.s32.totalorder %s21, 1
      %p189 = por %p187, %p188
      %p191 = scmp.ne.s32.totalorder %s176, %s190
      %p192 = scmp.eq.s32.totalorder %s21, 0
      %p193 = por %p191, %p192
      %s195 = sadd.s32 %s194, 1
      %p198 = scmp.eq.s32.totalorder %s15, 1
      %p199 = scmp.ne.s32.totalorder %s194, %s196
      %p200 = scmp.eq.s32.totalorder %s15, 0
      %p201 = por %p199, %p200
      %p202 = scmp.ne.s32.totalorder %s194, %s196
      %p203 = scmp.eq.s32.totalorder %s20, 1
      %p204 = por %p202, %p203
      %p205 = scmp.ne.s32.totalorder %s196, %s197
      %p206 = scmp.eq.s32.totalorder %s20, 0
      %p207 = por %p205, %p206
      %p208 = scmp.ne.s32.totalorder %s196, %s197
      %p209 = scmp.eq.s32.totalorder %s21, 1
      %p210 = por %p208, %p209
      %p212 = scmp.ne.s32.totalorder %s197, %s211
      %p213 = scmp.eq.s32.totalorder %s21, 0
      %p214 = por %p212, %p213
      %s216 = sadd.s32 %s215, 1
      %p219 = scmp.eq.s32.totalorder %s15, 1
      %p220 = scmp.ne.s32.totalorder %s215, %s217
      %p221 = scmp.eq.s32.totalorder %s15, 0
      %p222 = por %p220, %p221
      %p223 = scmp.ne.s32.totalorder %s215, %s217
      %p224 = scmp.eq.s32.totalorder %s20, 1
      %p225 = por %p223, %p224
      %p226 = scmp.ne.s32.totalorder %s217, %s218
      %p227 = scmp.eq.s32.totalorder %s20, 0
      %p228 = por %p226, %p227
      %p229 = scmp.ne.s32.totalorder %s217, %s218
      %p230 = scmp.eq.s32.totalorder %s21, 1
      %p231 = por %p229, %p230
      %p233 = scmp.ne.s32.totalorder %s218, %s232
      %p234 = scmp.eq.s32.totalorder %s21, 0
      %p235 = por %p233, %p234
      %p236 = scmp.le.s32.totalorder 1, %s15
      %p237 = scmp.lt.s32.totalorder %s15, 3
      %p238 = pnand %p236, %p237
      %p239 = pneg %p238
      // Predicated region
      $region9: #{custom_bert2lstm_forward.3} parent=5 // pred_check
        _
      $region10: #{custom_bert2lstm_forward.3} parent=5 // pred_check_branch
        %241 = sbr.rel (%p238) target = $region12
      $region11: #{custom_bert2lstm_forward.3} parent=5 // pred_region
        %s242 = ssub.s32 %s15, 1
        // Predicated region
        $region13: #{custom_bert2lstm_forward.3} parent=11 // pred_check
          %p243 = pneg %p144
        $region14: #{custom_bert2lstm_forward.3} parent=11 // pred_check_branch
          %245 = sbr.rel (%p243) target = $region16
        $region15: #{custom_bert2lstm_forward.3} parent=11 // pred_region
          _
        $region16: #{custom_bert2lstm_forward.3} parent=11 // pred_fallthru
          _
        // Predicated region
        $region17: #{custom_bert2lstm_forward.3} parent=11 // pred_check
          %p246 = pneg %p165
        $region18: #{custom_bert2lstm_forward.3} parent=11 // pred_check_branch
          %248 = sbr.rel (%p246) target = $region20
        $region19: #{custom_bert2lstm_forward.3} parent=11 // pred_region
          _
        $region20: #{custom_bert2lstm_forward.3} parent=11 // pred_fallthru
          _
        // Predicated region
        $region21: #{custom_bert2lstm_forward.3} parent=11 // pred_check
          %p249 = pneg %p186
        $region22: #{custom_bert2lstm_forward.3} parent=11 // pred_check_branch
          %251 = sbr.rel (%p249) target = $region24
        $region23: #{custom_bert2lstm_forward.3} parent=11 // pred_region
          _
        $region24: #{custom_bert2lstm_forward.3} parent=11 // pred_fallthru
          _
        // Predicated region
        $region25: #{custom_bert2lstm_forward.3} parent=11 // pred_check
          %p252 = pneg %p207
        $region26: #{custom_bert2lstm_forward.3} parent=11 // pred_check_branch
          %254 = sbr.rel (%p252) target = $region28
        $region27: #{custom_bert2lstm_forward.3} parent=11 // pred_region
          _
        $region28: #{custom_bert2lstm_forward.3} parent=11 // pred_fallthru
          _
      $region12: #{custom_bert2lstm_forward.3} parent=5 // pred_fallthru
        _
      %p255 = scmp.lt.s32.totalorder %s15, 2
      // Predicated region
      $region29: #{custom_bert2lstm_forward.3} parent=5 // pred_check
        %p256 = pneg %p255
      $region30: #{custom_bert2lstm_forward.3} parent=5 // pred_check_branch
        %258 = sbr.rel (%p256) target = $region32
      $region31: #{custom_bert2lstm_forward.3} parent=5 // pred_region
        // Predicated region
        $region33: #{custom_bert2lstm_forward.3} parent=31 // pred_check
          %p259 = pneg %p35
        $region34: #{custom_bert2lstm_forward.3} parent=31 // pred_check_branch
          %261 = sbr.rel (%p259) target = $region36
        $region35: #{custom_bert2lstm_forward.3} parent=31 // pred_region
          %s262 = sand.u32 %s25, 1
          %s263 = sand.u32 %s25, 1
          %s264 = smul.addr %s263, 8
          %s265 = scalar_lea.vmem [#allocation6], %s264
          %s266 = smul.u32 4, %s15
          %s267 = smul.addr %s266, 2
          %s268 = smul.addr %s267, 2
          %s269 = scalar_lea.vmem %s0, %s268
          // Predicated region
          $region37: #{custom_bert2lstm_forward.3} parent=35 // pred_check
            _
          $region38: #{custom_bert2lstm_forward.3} parent=35 // pred_check_branch
            %271 = sbr.rel (0) target = $region40
          $region39: #{custom_bert2lstm_forward.3} parent=35 // pred_region
            // Predicated region
            $region41: #{custom_bert2lstm_forward.3} parent=39 // pred_check
              _
            $region42: #{custom_bert2lstm_forward.3} parent=39 // pred_check_branch
              %273 = sbr.rel target = $region44
            $region43: #{custom_bert2lstm_forward.3} parent=39 // pred_region
              // Predicated region
              $region56: #{custom_bert2lstm_forward.3} parent=43 // pred_check
                _
              $region57: #{custom_bert2lstm_forward.3} parent=43 // pred_check_branch
                %294 = sbr.rel (0) target = $region59
              $region58: #{custom_bert2lstm_forward.3} parent=43 // pred_region
                loop: start=0, step=1, limit=1
                $region60: #{custom_bert2lstm_forward.3} parent=58 // loop_pre_header
                  _
                $region61: #{custom_bert2lstm_forward.3} parent=58 // loop_header
                  %s296 = sphi 0, %s300
                  %p297 = scmp.ge.s32.totalorder %s296, 1
                  %s301 = sphi %s269, %s269
                  %s302 = sphi %s265, %s265
                $region62: #{custom_bert2lstm_forward.3} parent=58 // loop_header_branch
                  %299 = sbr.rel (%p297) target = $region66
                $region63: #{custom_bert2lstm_forward.3} parent=58 // loop_body
                  _
                $region64: #{custom_bert2lstm_forward.3} parent=58 // loop_footer
                  %s300 = sadd.s32 1, %s296
                $region65: #{custom_bert2lstm_forward.3} parent=58 // loop_footer_branch
                  %295 = sbr.rel target = $region61
                $region66: #{custom_bert2lstm_forward.3} parent=58 // loop_exit
                  _
                loop: start=0, step=1, limit=1
                $region67: #{custom_bert2lstm_forward.3} parent=58 // loop_pre_header
                  _
                $region68: #{custom_bert2lstm_forward.3} parent=58 // loop_header
                  %s305 = sphi 0, %s309
                  %p306 = scmp.ge.s32.totalorder %s305, 1
                  %s310 = sphi %s269, %s269
                  %s311 = sphi %s265, %s265
                $region69: #{custom_bert2lstm_forward.3} parent=58 // loop_header_branch
                  %308 = sbr.rel (%p306) target = $region73
                $region70: #{custom_bert2lstm_forward.3} parent=58 // loop_body
                  %v312 = vld [vmem:[%s310] sm:$0x3]
                  %313 = vst [vmem:[%s311] sm:$0x3] %v312
                  %v314 = vld [vmem:[%s310 + $0x4] sm:$0x3]
                  %315 = vst [vmem:[%s311 + $0x2] sm:$0x3] %v314
                  %v316 = vld [vmem:[%s310 + $0x8] sm:$0x3]
                  %317 = vst [vmem:[%s311 + $0x4] sm:$0x3] %v316
                  %v318 = vld [vmem:[%s310 + $0xc] sm:$0x3]
                  %319 = vst [vmem:[%s311 + $0x6] sm:$0x3] %v318
                $region71: #{custom_bert2lstm_forward.3} parent=58 // loop_footer
                  %s309 = sadd.s32 1, %s305
                $region72: #{custom_bert2lstm_forward.3} parent=58 // loop_footer_branch
                  %304 = sbr.rel target = $region68
                $region73: #{custom_bert2lstm_forward.3} parent=58 // loop_exit
                  _
              $region59: #{custom_bert2lstm_forward.3} parent=43 // pred_fallthru
                _
            $region44: #{custom_bert2lstm_forward.3} parent=39 // pred_fallthru
              _
            // Predicated region
            $region45: #{custom_bert2lstm_forward.3} parent=39 // pred_check
              _
            $region46: #{custom_bert2lstm_forward.3} parent=39 // pred_check_branch
              %275 = sbr.rel (0) target = $region48
            $region47: #{custom_bert2lstm_forward.3} parent=39 // pred_region
              loop: start=0, step=1, limit=1
              $region49: #{custom_bert2lstm_forward.3} parent=47 // loop_pre_header
                _
              $region50: #{custom_bert2lstm_forward.3} parent=47 // loop_header
                %s278 = sphi 0, %s282
                %p279 = scmp.ge.s32.totalorder %s278, 1
                %s283 = sphi %s269, %s269
                %s284 = sphi %s265, %s265
              $region51: #{custom_bert2lstm_forward.3} parent=47 // loop_header_branch
                %281 = sbr.rel (%p279) target = $region55
              $region52: #{custom_bert2lstm_forward.3} parent=47 // loop_body
                %v285 = vld [vmem:[%s283] sm:$0x3]
                %286 = vst [vmem:[%s284] sm:$0x3] %v285
                %v287 = vld [vmem:[%s283 + $0x4] sm:$0x3]
                %288 = vst [vmem:[%s284 + $0x2] sm:$0x3] %v287
                %v289 = vld [vmem:[%s283 + $0x8] sm:$0x3]
                %290 = vst [vmem:[%s284 + $0x4] sm:$0x3] %v289
                %v291 = vld [vmem:[%s283 + $0xc] sm:$0x3]
                %292 = vst [vmem:[%s284 + $0x6] sm:$0x3] %v291
              $region53: #{custom_bert2lstm_forward.3} parent=47 // loop_footer
                %s282 = sadd.s32 1, %s278
              $region54: #{custom_bert2lstm_forward.3} parent=47 // loop_footer_branch
                %277 = sbr.rel target = $region50
              $region55: #{custom_bert2lstm_forward.3} parent=47 // loop_exit
                _
            $region48: #{custom_bert2lstm_forward.3} parent=39 // pred_fallthru
              _
          $region40: #{custom_bert2lstm_forward.3} parent=35 // pred_fallthru
            _
          %320 = vnop
        $region36: #{custom_bert2lstm_forward.3} parent=31 // pred_fallthru
          _
        // Predicated region
        $region74: #{custom_bert2lstm_forward.3} parent=31 // pred_check
          %p321 = pneg %p63
        $region75: #{custom_bert2lstm_forward.3} parent=31 // pred_check_branch
          %323 = sbr.rel (%p321) target = $region77
        $region76: #{custom_bert2lstm_forward.3} parent=31 // pred_region
          %s324 = sand.u32 %s53, 1
          %s325 = sand.u32 %s53, 1
          %s326 = smul.addr %s325, 8
          %s327 = scalar_lea.vmem [#allocation7], %s326
          %s328 = ssub.s32 1, %s15
          %s329 = smul.u32 4, %s328
          %s330 = smul.addr %s329, 2
          %s331 = sadd.s32 1, %s330
          %s332 = smul.addr %s331, 2
          %s333 = scalar_lea.vmem %s1, %s332
          // Predicated region
          $region78: #{custom_bert2lstm_forward.3} parent=76 // pred_check
            _
          $region79: #{custom_bert2lstm_forward.3} parent=76 // pred_check_branch
            %335 = sbr.rel (0) target = $region81
          $region80: #{custom_bert2lstm_forward.3} parent=76 // pred_region
            // Predicated region
            $region82: #{custom_bert2lstm_forward.3} parent=80 // pred_check
              _
            $region83: #{custom_bert2lstm_forward.3} parent=80 // pred_check_branch
              %337 = sbr.rel target = $region85
            $region84: #{custom_bert2lstm_forward.3} parent=80 // pred_region
              // Predicated region
              $region97: #{custom_bert2lstm_forward.3} parent=84 // pred_check
                _
              $region98: #{custom_bert2lstm_forward.3} parent=84 // pred_check_branch
                %358 = sbr.rel (0) target = $region100
              $region99: #{custom_bert2lstm_forward.3} parent=84 // pred_region
                loop: start=0, step=1, limit=1
                $region101: #{custom_bert2lstm_forward.3} parent=99 // loop_pre_header
                  _
                $region102: #{custom_bert2lstm_forward.3} parent=99 // loop_header
                  %s360 = sphi 0, %s364
                  %p361 = scmp.ge.s32.totalorder %s360, 1
                  %s365 = sphi %s333, %s333
                  %s366 = sphi %s327, %s327
                $region103: #{custom_bert2lstm_forward.3} parent=99 // loop_header_branch
                  %363 = sbr.rel (%p361) target = $region107
                $region104: #{custom_bert2lstm_forward.3} parent=99 // loop_body
                  _
                $region105: #{custom_bert2lstm_forward.3} parent=99 // loop_footer
                  %s364 = sadd.s32 1, %s360
                $region106: #{custom_bert2lstm_forward.3} parent=99 // loop_footer_branch
                  %359 = sbr.rel target = $region102
                $region107: #{custom_bert2lstm_forward.3} parent=99 // loop_exit
                  _
                loop: start=0, step=1, limit=1
                $region108: #{custom_bert2lstm_forward.3} parent=99 // loop_pre_header
                  _
                $region109: #{custom_bert2lstm_forward.3} parent=99 // loop_header
                  %s369 = sphi 0, %s373
                  %p370 = scmp.ge.s32.totalorder %s369, 1
                  %s374 = sphi %s333, %s333
                  %s375 = sphi %s327, %s327
                $region110: #{custom_bert2lstm_forward.3} parent=99 // loop_header_branch
                  %372 = sbr.rel (%p370) target = $region114
                $region111: #{custom_bert2lstm_forward.3} parent=99 // loop_body
                  %v376 = vld [vmem:[%s374] sm:$0x3]
                  %377 = vst [vmem:[%s375] sm:$0x3] %v376
                  %v378 = vld [vmem:[%s374 + $0x4] sm:$0x3]
                  %379 = vst [vmem:[%s375 + $0x2] sm:$0x3] %v378
                  %v380 = vld [vmem:[%s374 + $0x8] sm:$0x3]
                  %381 = vst [vmem:[%s375 + $0x4] sm:$0x3] %v380
                  %v382 = vld [vmem:[%s374 + $0xc] sm:$0x3]
                  %383 = vst [vmem:[%s375 + $0x6] sm:$0x3] %v382
                $region112: #{custom_bert2lstm_forward.3} parent=99 // loop_footer
                  %s373 = sadd.s32 1, %s369
                $region113: #{custom_bert2lstm_forward.3} parent=99 // loop_footer_branch
                  %368 = sbr.rel target = $region109
                $region114: #{custom_bert2lstm_forward.3} parent=99 // loop_exit
                  _
              $region100: #{custom_bert2lstm_forward.3} parent=84 // pred_fallthru
                _
            $region85: #{custom_bert2lstm_forward.3} parent=80 // pred_fallthru
              _
            // Predicated region
            $region86: #{custom_bert2lstm_forward.3} parent=80 // pred_check
              _
            $region87: #{custom_bert2lstm_forward.3} parent=80 // pred_check_branch
              %339 = sbr.rel (0) target = $region89
            $region88: #{custom_bert2lstm_forward.3} parent=80 // pred_region
              loop: start=0, step=1, limit=1
              $region90: #{custom_bert2lstm_forward.3} parent=88 // loop_pre_header
                _
              $region91: #{custom_bert2lstm_forward.3} parent=88 // loop_header
                %s342 = sphi 0, %s346
                %p343 = scmp.ge.s32.totalorder %s342, 1
                %s347 = sphi %s333, %s333
                %s348 = sphi %s327, %s327
              $region92: #{custom_bert2lstm_forward.3} parent=88 // loop_header_branch
                %345 = sbr.rel (%p343) target = $region96
              $region93: #{custom_bert2lstm_forward.3} parent=88 // loop_body
                %v349 = vld [vmem:[%s347] sm:$0x3]
                %350 = vst [vmem:[%s348] sm:$0x3] %v349
                %v351 = vld [vmem:[%s347 + $0x4] sm:$0x3]
                %352 = vst [vmem:[%s348 + $0x2] sm:$0x3] %v351
                %v353 = vld [vmem:[%s347 + $0x8] sm:$0x3]
                %354 = vst [vmem:[%s348 + $0x4] sm:$0x3] %v353
                %v355 = vld [vmem:[%s347 + $0xc] sm:$0x3]
                %356 = vst [vmem:[%s348 + $0x6] sm:$0x3] %v355
              $region94: #{custom_bert2lstm_forward.3} parent=88 // loop_footer
                %s346 = sadd.s32 1, %s342
              $region95: #{custom_bert2lstm_forward.3} parent=88 // loop_footer_branch
                %341 = sbr.rel target = $region91
              $region96: #{custom_bert2lstm_forward.3} parent=88 // loop_exit
                _
            $region89: #{custom_bert2lstm_forward.3} parent=80 // pred_fallthru
              _
          $region81: #{custom_bert2lstm_forward.3} parent=76 // pred_fallthru
            _
          %384 = vnop
        $region77: #{custom_bert2lstm_forward.3} parent=31 // pred_fallthru
          _
        // Predicated region
        $region115: #{custom_bert2lstm_forward.3} parent=31 // pred_check
          %p385 = pneg %p89
        $region116: #{custom_bert2lstm_forward.3} parent=31 // pred_check_branch
          %387 = sbr.rel (%p385) target = $region118
        $region117: #{custom_bert2lstm_forward.3} parent=31 // pred_region
          %s388 = smul.u32 4, %s15
          %p389 = scmp.lt.s32.totalorder %s388, 7
          %s390 = scalar_select %p389, %s388, 7
          %s391 = smul.addr %s390, 2
          %s392 = scalar_lea.vmem %s2, %s391
          %s393 = smul.u32 4, %s15
        $region118: #{custom_bert2lstm_forward.3} parent=31 // pred_fallthru
          _
        // Predicated region
        $region119: #{custom_bert2lstm_forward.3} parent=31 // pred_check
          %p394 = pneg %p117
        $region120: #{custom_bert2lstm_forward.3} parent=31 // pred_check_branch
          %396 = sbr.rel (%p394) target = $region122
        $region121: #{custom_bert2lstm_forward.3} parent=31 // pred_region
          %s397 = ssub.s32 1, %s15
          %s398 = smul.u32 4, %s397
          %p399 = scmp.lt.s32.totalorder %s398, 7
          %s400 = scalar_select %p399, %s398, 7
          %s401 = smul.addr %s400, 2
          %s402 = scalar_lea.vmem %s3, %s401
          %s403 = ssub.s32 1, %s15
          %s404 = smul.u32 4, %s403
        $region122: #{custom_bert2lstm_forward.3} parent=31 // pred_fallthru
          _
      $region32: #{custom_bert2lstm_forward.3} parent=5 // pred_fallthru
        _
      %p405 = scmp.le.s32.totalorder 1, %s15
      %p406 = scmp.lt.s32.totalorder %s15, 3
      %p407 = pnand %p405, %p406
      %p408 = pneg %p407
      // Predicated region
      $region123: #{custom_bert2lstm_forward.3} parent=5 // pred_check
        _
      $region124: #{custom_bert2lstm_forward.3} parent=5 // pred_check_branch
        %410 = sbr.rel (%p407) target = $region126
      $region125: #{custom_bert2lstm_forward.3} parent=5 // pred_region
        %s411 = ssub.s32 %s15, 1
        %s412 = sand.u32 %s28, 1
        %s413 = sand.u32 %s28, 1
        %s414 = smul.addr %s413, 8
        %s415 = scalar_lea.vmem [#allocation6], %s414
        // Predicated region
        $region127: #{custom_bert2lstm_forward.3} parent=125 // pred_check
          %p416 = pneg %p41
        $region128: #{custom_bert2lstm_forward.3} parent=125 // pred_check_branch
          %418 = sbr.rel (%p416) target = $region130
        $region129: #{custom_bert2lstm_forward.3} parent=125 // pred_region
          _
        $region130: #{custom_bert2lstm_forward.3} parent=125 // pred_fallthru
          _
        %s419 = sand.u32 %s56, 1
        %s420 = sand.u32 %s56, 1
        %s421 = smul.addr %s420, 8
        %s422 = scalar_lea.vmem [#allocation7], %s421
        // Predicated region
        $region131: #{custom_bert2lstm_forward.3} parent=125 // pred_check
          %p423 = pneg %p69
        $region132: #{custom_bert2lstm_forward.3} parent=125 // pred_check_branch
          %425 = sbr.rel (%p423) target = $region134
        $region133: #{custom_bert2lstm_forward.3} parent=125 // pred_region
          _
        $region134: #{custom_bert2lstm_forward.3} parent=125 // pred_fallthru
          _
        %s426 = sand.u32 %s28, 1
        %s427 = sand.u32 %s28, 1
        %s428 = smul.addr %s427, 8
        %s429 = scalar_lea.vmem [#allocation6], %s428
        %p430 = pneg %p41
        %p431 = pneg %p38
        %s432 = sand.u32 %s56, 1
        %s433 = sand.u32 %s56, 1
        %s434 = smul.addr %s433, 8
        %s435 = scalar_lea.vmem [#allocation7], %s434
        %p436 = pneg %p69
        %p437 = pneg %p66
        %s438 = smul.u32 4, %s20
        %p439 = scmp.lt.s32.totalorder %s438, 7
        %s440 = scalar_select %p439, %s438, 7
        %s441 = smul.addr %s440, 2
        %s442 = scalar_lea.vmem %s2, %s441
        %p443 = pneg %p95
        %p444 = pneg %p92
        %s445 = ssub.s32 1, %s20
        %s446 = smul.u32 4, %s445
        %p447 = scmp.lt.s32.totalorder %s446, 7
        %s448 = scalar_select %p447, %s446, 7
        %s449 = smul.addr %s448, 2
        %s450 = scalar_lea.vmem %s3, %s449
        %p451 = pneg %p123
        %p452 = pneg %p120
        %p453 = pneg %p144
        %p454 = pneg %p141
        %p455 = pneg %p165
        %p456 = pneg %p162
        %p457 = pneg %p186
        %p458 = pneg %p183
        %p459 = pneg %p207
        %p460 = pneg %p204
        %p461 = pneg %p228
        %p462 = pneg %p225
        %s463 = smul.u32 4, %s20
        %s464 = ssub.s32 1, %s20
        %s465 = smul.u32 4, %s464
        %s466 = smul.u32 4, %s20
        %p467 = scmp.lt.s32.totalorder %s466, 7
        %s468 = scalar_select %p467, %s466, 7
        %s469 = smul.addr %s468, 2
        %s470 = scalar_lea.vmem %s2, %s469
        %s471 = smul.u32 4, %s20
        %s472 = ssub.s32 1, %s20
        %s473 = smul.u32 4, %s472
        %p474 = scmp.lt.s32.totalorder %s473, 7
        %s475 = scalar_select %p474, %s473, 7
        %s476 = smul.addr %s475, 2
        %s477 = scalar_lea.vmem %s3, %s476
        %s478 = ssub.s32 1, %s20
        %s479 = smul.u32 4, %s478
        %p481 = scmp.eq.s32.totalorder %s20, 0
        // Predicated region
        $region135: #{custom_bert2lstm_forward.3} parent=125 // pred_check
          %p482 = pneg %p481
        $region136: #{custom_bert2lstm_forward.3} parent=125 // pred_check_branch
          %484 = sbr.rel (%p482) target = $region138
        $region137: #{custom_bert2lstm_forward.3} parent=125 // pred_region
          %vm485 = vcmask 254976
          %486 = vst.msk [vmem:[#allocation2] sm:$0x3] %vm485, 0.0
          %487 = vst.msk [vmem:[#allocation3] sm:$0x3] %vm485, 0.0
          %488 = vst.msk [vmem:[#allocation4] sm:$0x3] %vm485, 0.0
          %489 = vst.msk [vmem:[#allocation5] sm:$0x3] %vm485, 0.0
        $region138: #{custom_bert2lstm_forward.3} parent=125 // pred_fallthru
          _
        %v490 = vld [vmem:[%s4] sm:$0xf]
        %v491 = vld [vmem:[%s4 + $0x4] sm:$0xf]
        %v492 = vld [vmem:[%s4 + $0x8] sm:$0xf]
        %v493 = vld [vmem:[%s4 + $0xc] sm:$0xf]
        %v494 = vld [vmem:[%s5] sm:$0xf]
        %v495 = vld [vmem:[%s5 + $0x4] sm:$0xf]
        %v496 = vld [vmem:[%s5 + $0x8] sm:$0xf]
        %v497 = vld [vmem:[%s5 + $0xc] sm:$0xf]
        %v498 = vld [vmem:[#allocation2] sm:$0x3]
        %v499 = vld [vmem:[#allocation3] sm:$0x3]
        %v500 = vld [vmem:[#allocation4] sm:$0x3]
        %v501 = vld [vmem:[#allocation5] sm:$0x3]
        %v502 = vld [vmem:[%s415] sm:$0x3]
        %v503 = vld [vmem:[%s470] sm:$0x3]
        %v504 = vpack.c.bf16 %v498, %v498
        %v509 = vunpack.c.l.b16 %v490
        %v510 = vunpack.c.l.b16 %v491
        %v511 = vunpack.c.l.b16 %v492
        %v512 = vunpack.c.l.b16 %v493
        %v513 = vpack.c.b16 %v510, %v509
        %v514 = vpack.c.b16 %v512, %v511
        %vm517 = vcmask 261120
        %v519 = vsel %vm517, %v504, 0
        %521 = vmatprep.subr.bf16.mxu0 0
        %522 = vmatpush1.bf16.msra.mxu0 %v513
        %523 = vmatprep.subr.bf16.mxu0 0
        %524 = vmatpush1.bf16.msra.mxu0 %v514
        %525 = vmatprep.subr.bf16.mxu0 0
        %526 = vmatpush1.bf16.msra.mxu0 0
        %527 = vmatprep.subr.bf16.mxu0 0
        %528 = vmatpush1.bf16.msra.mxu0 0
        %529 = vmatprep.subr.bf16.mxu0 0
        %530 = vmatpush1.bf16.msra.mxu0 0
        %531 = vmatprep.subr.bf16.mxu0 0
        %532 = vmatpush1.bf16.msra.mxu0 0
        %533 = vmatprep.subr.bf16.mxu0 0
        %534 = vmatpush1.bf16.msra.mxu0 0
        %535 = vmatprep.subr.bf16.mxu0 0
        %536 = vmatpush1.bf16.msra.mxu0 0
        %537 = vmatprep.subr.bf16.mxu0 0
        %538 = vmatpush1.bf16.msra.mxu0 0
        %539 = vmatprep.subr.bf16.mxu0 0
        %540 = vmatpush1.bf16.msra.mxu0 0
        %541 = vmatprep.subr.bf16.mxu0 0
        %542 = vmatpush1.bf16.msra.mxu0 0
        %543 = vmatprep.subr.bf16.mxu0 0
        %544 = vmatpush1.bf16.msra.mxu0 0
        %545 = vmatprep.subr.bf16.mxu0 0
        %546 = vmatpush1.bf16.msra.mxu0 0
        %547 = vmatprep.subr.bf16.mxu0 0
        %548 = vmatpush1.bf16.msra.mxu0 0
        %549 = vmatprep.subr.bf16.mxu0 0
        %550 = vmatpush1.bf16.msra.mxu0 0
        %551 = vmatprep.subr.bf16.mxu0 0
        %552 = vmatpush1.bf16.msra.mxu0 0
        %553 = vmatprep.mubr.bf16.mxu0 0
        %554 = vmatmul.mubr.bf16.gmra.mrb[0].mxu0 %v519
        %v555 = vpop.f32.mrb[0].mxu0
        %v556 = vadd.f32 0.0, %v555
        %v557 = vpop.f32.mrb[0].mxu0
        %v558 = vpop.f32.mrb[0].mxu0
        %v559 = vpop.f32.mrb[0].mxu0
        %560 = vdwg.mxu0
        %v561 = vadd.f32 %v502, %v556
        %v562 = vxor.u32 %v561, 2147483648
        %v563 = vmul.f32 %v562, 1.442695
        %v564 = vpow.pop %v563
        %v565 = vadd.f32 %v564, 1.0
        %v566 = vrcp.pop %v565
        %v567 = vmul.f32 1.0, %v566
        %v568 = vtanh.pop %v561
        %570 = vrot.lane.b32.xlu0 %v499, 32
        %v571 = vpop.permute.xlu0 %570
        %v573 = vmul.f32 %v567, %v571
        %575 = vrot.lane.b32.xlu0 %v568, 64
        %v576 = vpop.permute.xlu0 %575
        %v578 = vmul.f32 %v567, %v576
        %580 = vrot.lane.b32.xlu0 %v578, 32
        %v581 = vpop.permute.xlu0 %580
        %v583 = vadd.f32 %v573, %v581
        %v584 = vtanh.pop %v583
        %586 = vrot.lane.b32.xlu0 %v584, 64
        %v587 = vpop.permute.xlu0 %586
        %v589 = vmul.f32 %v567, %v587
        %591 = vset.pattern.permute.xlu0 0
        %592 = vperm.xlu0 %591, %v503
        %v593 = vpop.permute.xlu0 %592
        %v595 = vmul.f32 %v593, %v589
        %v596 = vsub.f32 1.0, %v503
        %598 = vset.pattern.permute.xlu0 0
        %599 = vperm.xlu0 %598, %v596
        %v600 = vpop.permute.xlu0 %599
        %v602 = vmul.f32 %v600, %v498
        %604 = vrot.lane.b32.xlu0 %v602, 96
        %v605 = vpop.permute.xlu0 %604
        %v607 = vadd.f32 %v595, %v605
        %v608 = vmul.f32 %v593, %v583
        %v609 = vmul.f32 %v600, %v499
        %611 = vrot.lane.b32.xlu0 %v609, 32
        %v612 = vpop.permute.xlu0 %611
        %v614 = vadd.f32 %v608, %v612
        %s615 = scalar_lea.vmem %s422, 6 [#allocation7]
        %v616 = vld [vmem:[%s615] sm:$0x3]
        %s617 = scalar_lea.vmem %s477, 6
        %v618 = vld [vmem:[%s617] sm:$0x3]
        %v619 = vpack.c.bf16 %v500, %v500
        %v624 = vunpack.c.l.b16 %v494
        %v625 = vunpack.c.l.b16 %v495
        %v626 = vunpack.c.l.b16 %v496
        %v627 = vunpack.c.l.b16 %v497
        %v628 = vpack.c.b16 %v625, %v624
        %v629 = vpack.c.b16 %v627, %v626
        %v633 = vsel %vm517, %v619, 0
        %635 = vmatprep.subr.bf16.mxu0 0
        %636 = vmatpush1.bf16.msra.mxu0 %v628
        %637 = vmatprep.subr.bf16.mxu0 0
        %638 = vmatpush1.bf16.msra.mxu0 %v629
        %639 = vmatprep.subr.bf16.mxu0 0
        %640 = vmatpush1.bf16.msra.mxu0 0
        %641 = vmatprep.subr.bf16.mxu0 0
        %642 = vmatpush1.bf16.msra.mxu0 0
        %643 = vmatprep.subr.bf16.mxu0 0
        %644 = vmatpush1.bf16.msra.mxu0 0
        %645 = vmatprep.subr.bf16.mxu0 0
        %646 = vmatpush1.bf16.msra.mxu0 0
        %647 = vmatprep.subr.bf16.mxu0 0
        %648 = vmatpush1.bf16.msra.mxu0 0
        %649 = vmatprep.subr.bf16.mxu0 0
        %650 = vmatpush1.bf16.msra.mxu0 0
        %651 = vmatprep.subr.bf16.mxu0 0
        %652 = vmatpush1.bf16.msra.mxu0 0
        %653 = vmatprep.subr.bf16.mxu0 0
        %654 = vmatpush1.bf16.msra.mxu0 0
        %655 = vmatprep.subr.bf16.mxu0 0
        %656 = vmatpush1.bf16.msra.mxu0 0
        %657 = vmatprep.subr.bf16.mxu0 0
        %658 = vmatpush1.bf16.msra.mxu0 0
        %659 = vmatprep.subr.bf16.mxu0 0
        %660 = vmatpush1.bf16.msra.mxu0 0
        %661 = vmatprep.subr.bf16.mxu0 0
        %662 = vmatpush1.bf16.msra.mxu0 0
        %663 = vmatprep.subr.bf16.mxu0 0
        %664 = vmatpush1.bf16.msra.mxu0 0
        %665 = vmatprep.subr.bf16.mxu0 0
        %666 = vmatpush1.bf16.msra.mxu0 0
        %667 = vmatprep.mubr.bf16.mxu0 0
        %668 = vmatmul.mubr.bf16.gmra.mrb[0].mxu0 %v633
        %v669 = vpop.f32.mrb[0].mxu0
        %v670 = vadd.f32 0.0, %v669
        %v671 = vpop.f32.mrb[0].mxu0
        %v672 = vpop.f32.mrb[0].mxu0
        %v673 = vpop.f32.mrb[0].mxu0
        %674 = vdwg.mxu0
        %v675 = vadd.f32 %v616, %v670
        %v676 = vxor.u32 %v675, 2147483648
        %v677 = vmul.f32 %v676, 1.442695
        %v678 = vpow.pop %v677
        %v679 = vadd.f32 %v678, 1.0
        %v680 = vrcp.pop %v679
        %v681 = vmul.f32 1.0, %v680
        %v682 = vtanh.pop %v675
        %684 = vrot.lane.b32.xlu0 %v501, 32
        %v685 = vpop.permute.xlu0 %684
        %v687 = vmul.f32 %v681, %v685
        %689 = vrot.lane.b32.xlu0 %v682, 64
        %v690 = vpop.permute.xlu0 %689
        %v692 = vmul.f32 %v681, %v690
        %694 = vrot.lane.b32.xlu0 %v692, 32
        %v695 = vpop.permute.xlu0 %694
        %v697 = vadd.f32 %v687, %v695
        %v698 = vtanh.pop %v697
        %700 = vrot.lane.b32.xlu0 %v698, 64
        %v701 = vpop.permute.xlu0 %700
        %v703 = vmul.f32 %v681, %v701
        %705 = vset.pattern.permute.xlu0 0
        %706 = vperm.xlu0 %705, %v618
        %v707 = vpop.permute.xlu0 %706
        %v709 = vmul.f32 %v707, %v703
        %v710 = vsub.f32 1.0, %v618
        %712 = vset.pattern.permute.xlu0 0
        %713 = vperm.xlu0 %712, %v710
        %v714 = vpop.permute.xlu0 %713
        %v716 = vmul.f32 %v714, %v500
        %718 = vrot.lane.b32.xlu0 %v716, 96
        %v719 = vpop.permute.xlu0 %718
        %v721 = vadd.f32 %v709, %v719
        %v722 = vmul.f32 %v707, %v697
        %v723 = vmul.f32 %v714, %v501
        %725 = vrot.lane.b32.xlu0 %v723, 32
        %v726 = vpop.permute.xlu0 %725
        %v728 = vadd.f32 %v722, %v726
        %s729 = scalar_lea.vmem %s415, 2 [#allocation6]
        %v730 = vld [vmem:[%s729] sm:$0x3]
        %s731 = scalar_lea.vmem %s470, 2
        %v732 = vld [vmem:[%s731] sm:$0x3]
        %v733 = vpack.c.bf16 %v607, %v607
        %735 = vrot.lane.b32.xlu0 %v733, 32
        %v736 = vpop.permute.xlu0 %735
        %v738 = vsel %vm517, %v736, 0
        %740 = vmatprep.subr.bf16.mxu0 0
        %741 = vmatpush1.bf16.msra.mxu0 %v513
        %742 = vmatprep.subr.bf16.mxu0 0
        %743 = vmatpush1.bf16.msra.mxu0 %v514
        %744 = vmatprep.subr.bf16.mxu0 0
        %745 = vmatpush1.bf16.msra.mxu0 0
        %746 = vmatprep.subr.bf16.mxu0 0
        %747 = vmatpush1.bf16.msra.mxu0 0
        %748 = vmatprep.subr.bf16.mxu0 0
        %749 = vmatpush1.bf16.msra.mxu0 0
        %750 = vmatprep.subr.bf16.mxu0 0
        %751 = vmatpush1.bf16.msra.mxu0 0
        %752 = vmatprep.subr.bf16.mxu0 0
        %753 = vmatpush1.bf16.msra.mxu0 0
        %754 = vmatprep.subr.bf16.mxu0 0
        %755 = vmatpush1.bf16.msra.mxu0 0
        %756 = vmatprep.subr.bf16.mxu0 0
        %757 = vmatpush1.bf16.msra.mxu0 0
        %758 = vmatprep.subr.bf16.mxu0 0
        %759 = vmatpush1.bf16.msra.mxu0 0
        %760 = vmatprep.subr.bf16.mxu0 0
        %761 = vmatpush1.bf16.msra.mxu0 0
        %762 = vmatprep.subr.bf16.mxu0 0
        %763 = vmatpush1.bf16.msra.mxu0 0
        %764 = vmatprep.subr.bf16.mxu0 0
        %765 = vmatpush1.bf16.msra.mxu0 0
        %766 = vmatprep.subr.bf16.mxu0 0
        %767 = vmatpush1.bf16.msra.mxu0 0
        %768 = vmatprep.subr.bf16.mxu0 0
        %769 = vmatpush1.bf16.msra.mxu0 0
        %770 = vmatprep.subr.bf16.mxu0 0
        %771 = vmatpush1.bf16.msra.mxu0 0
        %772 = vmatprep.mubr.bf16.mxu0 0
        %773 = vmatmul.mubr.bf16.gmra.mrb[0].mxu0 %v738
        %v774 = vpop.f32.mrb[0].mxu0
        %v775 = vadd.f32 0.0, %v774
        %v776 = vpop.f32.mrb[0].mxu0
        %v777 = vpop.f32.mrb[0].mxu0
        %v778 = vpop.f32.mrb[0].mxu0
        %779 = vdwg.mxu0
        %v780 = vadd.f32 %v730, %v775
        %v781 = vxor.u32 %v780, 2147483648
        %v782 = vmul.f32 %v781, 1.442695
        %v783 = vpow.pop %v782
        %v784 = vadd.f32 %v783, 1.0
        %v785 = vrcp.pop %v784
        %v786 = vmul.f32 1.0, %v785
        %v787 = vtanh.pop %v780
        %v788 = vmul.f32 %v786, %v614
        %790 = vrot.lane.b32.xlu0 %v787, 64
        %v791 = vpop.permute.xlu0 %790
        %v793 = vmul.f32 %v786, %v791
        %795 = vrot.lane.b32.xlu0 %v793, 32
        %v796 = vpop.permute.xlu0 %795
        %v798 = vadd.f32 %v788, %v796
        %v799 = vtanh.pop %v798
        %801 = vrot.lane.b32.xlu0 %v799, 64
        %v802 = vpop.permute.xlu0 %801
        %v804 = vmul.f32 %v786, %v802
        %806 = vset.pattern.permute.xlu0 0
        %807 = vperm.xlu0 %806, %v732
        %v808 = vpop.permute.xlu0 %807
        %v810 = vmul.f32 %v808, %v804
        %v811 = vsub.f32 1.0, %v732
        %813 = vset.pattern.permute.xlu0 0
        %814 = vperm.xlu0 %813, %v811
        %v815 = vpop.permute.xlu0 %814
        %v817 = vmul.f32 %v815, %v607
        %v818 = vadd.f32 %v810, %v817
        %v819 = vmul.f32 %v808, %v798
        %v820 = vmul.f32 %v815, %v614
        %v821 = vadd.f32 %v819, %v820
        %s822 = scalar_lea.vmem %s422, 4 [#allocation7]
        %v823 = vld [vmem:[%s822] sm:$0x3]
        %s824 = scalar_lea.vmem %s477, 4
        %v825 = vld [vmem:[%s824] sm:$0x3]
        %v826 = vpack.c.bf16 %v721, %v721
        %828 = vrot.lane.b32.xlu0 %v826, 32
        %v829 = vpop.permute.xlu0 %828
        %v831 = vsel %vm517, %v829, 0
        %833 = vmatprep.subr.bf16.mxu0 0
        %834 = vmatpush1.bf16.msra.mxu0 %v628
        %835 = vmatprep.subr.bf16.mxu0 0
        %836 = vmatpush1.bf16.msra.mxu0 %v629
        %837 = vmatprep.subr.bf16.mxu0 0
        %838 = vmatpush1.bf16.msra.mxu0 0
        %839 = vmatprep.subr.bf16.mxu0 0
        %840 = vmatpush1.bf16.msra.mxu0 0
        %841 = vmatprep.subr.bf16.mxu0 0
        %842 = vmatpush1.bf16.msra.mxu0 0
        %843 = vmatprep.subr.bf16.mxu0 0
        %844 = vmatpush1.bf16.msra.mxu0 0
        %845 = vmatprep.subr.bf16.mxu0 0
        %846 = vmatpush1.bf16.msra.mxu0 0
        %847 = vmatprep.subr.bf16.mxu0 0
        %848 = vmatpush1.bf16.msra.mxu0 0
        %849 = vmatprep.subr.bf16.mxu0 0
        %850 = vmatpush1.bf16.msra.mxu0 0
        %851 = vmatprep.subr.bf16.mxu0 0
        %852 = vmatpush1.bf16.msra.mxu0 0
        %853 = vmatprep.subr.bf16.mxu0 0
        %854 = vmatpush1.bf16.msra.mxu0 0
        %855 = vmatprep.subr.bf16.mxu0 0
        %856 = vmatpush1.bf16.msra.mxu0 0
        %857 = vmatprep.subr.bf16.mxu0 0
        %858 = vmatpush1.bf16.msra.mxu0 0
        %859 = vmatprep.subr.bf16.mxu0 0
        %860 = vmatpush1.bf16.msra.mxu0 0
        %861 = vmatprep.subr.bf16.mxu0 0
        %862 = vmatpush1.bf16.msra.mxu0 0
        %863 = vmatprep.subr.bf16.mxu0 0
        %864 = vmatpush1.bf16.msra.mxu0 0
        %865 = vmatprep.mubr.bf16.mxu0 0
        %866 = vmatmul.mubr.bf16.gmra.mrb[0].mxu0 %v831
        %v867 = vpop.f32.mrb[0].mxu0
        %v868 = vadd.f32 0.0, %v867
        %v869 = vpop.f32.mrb[0].mxu0
        %v870 = vpop.f32.mrb[0].mxu0
        %v871 = vpop.f32.mrb[0].mxu0
        %872 = vdwg.mxu0
        %v873 = vadd.f32 %v823, %v868
        %v874 = vxor.u32 %v873, 2147483648
        %v875 = vmul.f32 %v874, 1.442695
        %v876 = vpow.pop %v875
        %v877 = vadd.f32 %v876, 1.0
        %v878 = vrcp.pop %v877
        %v879 = vmul.f32 1.0, %v878
        %v880 = vtanh.pop %v873
        %v881 = vmul.f32 %v879, %v728
        %883 = vrot.lane.b32.xlu0 %v880, 64
        %v884 = vpop.permute.xlu0 %883
        %v886 = vmul.f32 %v879, %v884
        %888 = vrot.lane.b32.xlu0 %v886, 32
        %v889 = vpop.permute.xlu0 %888
        %v891 = vadd.f32 %v881, %v889
        %v892 = vtanh.pop %v891
        %894 = vrot.lane.b32.xlu0 %v892, 64
        %v895 = vpop.permute.xlu0 %894
        %v897 = vmul.f32 %v879, %v895
        %899 = vset.pattern.permute.xlu0 0
        %900 = vperm.xlu0 %899, %v825
        %v901 = vpop.permute.xlu0 %900
        %v903 = vmul.f32 %v901, %v897
        %v904 = vsub.f32 1.0, %v825
        %906 = vset.pattern.permute.xlu0 0
        %907 = vperm.xlu0 %906, %v904
        %v908 = vpop.permute.xlu0 %907
        %v910 = vmul.f32 %v908, %v721
        %v911 = vadd.f32 %v903, %v910
        %v912 = vmul.f32 %v901, %v891
        %v913 = vmul.f32 %v908, %v728
        %v914 = vadd.f32 %v912, %v913
        %s915 = scalar_lea.vmem %s415, 4 [#allocation6]
        %v916 = vld [vmem:[%s915] sm:$0x3]
        %s917 = scalar_lea.vmem %s470, 4
        %v918 = vld [vmem:[%s917] sm:$0x3]
        %v919 = vpack.c.bf16 %v818, %v818
        %921 = vrot.lane.b32.xlu0 %v919, 32
        %v922 = vpop.permute.xlu0 %921
        %v924 = vsel %vm517, %v922, 0
        %926 = vmatprep.subr.bf16.mxu0 0
        %927 = vmatpush1.bf16.msra.mxu0 %v513
        %928 = vmatprep.subr.bf16.mxu0 0
        %929 = vmatpush1.bf16.msra.mxu0 %v514
        %930 = vmatprep.subr.bf16.mxu0 0
        %931 = vmatpush1.bf16.msra.mxu0 0
        %932 = vmatprep.subr.bf16.mxu0 0
        %933 = vmatpush1.bf16.msra.mxu0 0
        %934 = vmatprep.subr.bf16.mxu0 0
        %935 = vmatpush1.bf16.msra.mxu0 0
        %936 = vmatprep.subr.bf16.mxu0 0
        %937 = vmatpush1.bf16.msra.mxu0 0
        %938 = vmatprep.subr.bf16.mxu0 0
        %939 = vmatpush1.bf16.msra.mxu0 0
        %940 = vmatprep.subr.bf16.mxu0 0
        %941 = vmatpush1.bf16.msra.mxu0 0
        %942 = vmatprep.subr.bf16.mxu0 0
        %943 = vmatpush1.bf16.msra.mxu0 0
        %944 = vmatprep.subr.bf16.mxu0 0
        %945 = vmatpush1.bf16.msra.mxu0 0
        %946 = vmatprep.subr.bf16.mxu0 0
        %947 = vmatpush1.bf16.msra.mxu0 0
        %948 = vmatprep.subr.bf16.mxu0 0
        %949 = vmatpush1.bf16.msra.mxu0 0
        %950 = vmatprep.subr.bf16.mxu0 0
        %951 = vmatpush1.bf16.msra.mxu0 0
        %952 = vmatprep.subr.bf16.mxu0 0
        %953 = vmatpush1.bf16.msra.mxu0 0
        %954 = vmatprep.subr.bf16.mxu0 0
        %955 = vmatpush1.bf16.msra.mxu0 0
        %956 = vmatprep.subr.bf16.mxu0 0
        %957 = vmatpush1.bf16.msra.mxu0 0
        %958 = vmatprep.mubr.bf16.mxu0 0
        %959 = vmatmul.mubr.bf16.gmra.mrb[0].mxu0 %v924
        %v960 = vpop.f32.mrb[0].mxu0
        %v961 = vadd.f32 0.0, %v960
        %v962 = vpop.f32.mrb[0].mxu0
        %v963 = vpop.f32.mrb[0].mxu0
        %v964 = vpop.f32.mrb[0].mxu0
        %965 = vdwg.mxu0
        %v966 = vadd.f32 %v916, %v961
        %v967 = vxor.u32 %v966, 2147483648
        %v968 = vmul.f32 %v967, 1.442695
        %v969 = vpow.pop %v968
        %v970 = vadd.f32 %v969, 1.0
        %v971 = vrcp.pop %v970
        %v972 = vmul.f32 1.0, %v971
        %v973 = vtanh.pop %v966
        %v974 = vmul.f32 %v972, %v821
        %976 = vrot.lane.b32.xlu0 %v973, 64
        %v977 = vpop.permute.xlu0 %976
        %v979 = vmul.f32 %v972, %v977
        %981 = vrot.lane.b32.xlu0 %v979, 32
        %v982 = vpop.permute.xlu0 %981
        %v984 = vadd.f32 %v974, %v982
        %v985 = vtanh.pop %v984
        %987 = vrot.lane.b32.xlu0 %v985, 64
        %v988 = vpop.permute.xlu0 %987
        %v990 = vmul.f32 %v972, %v988
        %992 = vset.pattern.permute.xlu0 0
        %993 = vperm.xlu0 %992, %v918
        %v994 = vpop.permute.xlu0 %993
        %v996 = vmul.f32 %v994, %v990
        %v997 = vsub.f32 1.0, %v918
        %999 = vset.pattern.permute.xlu0 0
        %1000 = vperm.xlu0 %999, %v997
        %v1001 = vpop.permute.xlu0 %1000
        %v1003 = vmul.f32 %v1001, %v818
        %v1004 = vadd.f32 %v996, %v1003
        %v1005 = vmul.f32 %v994, %v984
        %v1006 = vmul.f32 %v1001, %v821
        %v1007 = vadd.f32 %v1005, %v1006
        %s1008 = scalar_lea.vmem %s422, 2 [#allocation7]
        %v1009 = vld [vmem:[%s1008] sm:$0x3]
        %s1010 = scalar_lea.vmem %s477, 2
        %v1011 = vld [vmem:[%s1010] sm:$0x3]
        %v1012 = vpack.c.bf16 %v911, %v911
        %1014 = vrot.lane.b32.xlu0 %v1012, 32
        %v1015 = vpop.permute.xlu0 %1014
        %v1017 = vsel %vm517, %v1015, 0
        %1019 = vmatprep.subr.bf16.mxu0 0
        %1020 = vmatpush1.bf16.msra.mxu0 %v628
        %1021 = vmatprep.subr.bf16.mxu0 0
        %1022 = vmatpush1.bf16.msra.mxu0 %v629
        %1023 = vmatprep.subr.bf16.mxu0 0
        %1024 = vmatpush1.bf16.msra.mxu0 0
        %1025 = vmatprep.subr.bf16.mxu0 0
        %1026 = vmatpush1.bf16.msra.mxu0 0
        %1027 = vmatprep.subr.bf16.mxu0 0
        %1028 = vmatpush1.bf16.msra.mxu0 0
        %1029 = vmatprep.subr.bf16.mxu0 0
        %1030 = vmatpush1.bf16.msra.mxu0 0
        %1031 = vmatprep.subr.bf16.mxu0 0
        %1032 = vmatpush1.bf16.msra.mxu0 0
        %1033 = vmatprep.subr.bf16.mxu0 0
        %1034 = vmatpush1.bf16.msra.mxu0 0
        %1035 = vmatprep.subr.bf16.mxu0 0
        %1036 = vmatpush1.bf16.msra.mxu0 0
        %1037 = vmatprep.subr.bf16.mxu0 0
        %1038 = vmatpush1.bf16.msra.mxu0 0
        %1039 = vmatprep.subr.bf16.mxu0 0
        %1040 = vmatpush1.bf16.msra.mxu0 0
        %1041 = vmatprep.subr.bf16.mxu0 0
        %1042 = vmatpush1.bf16.msra.mxu0 0
        %1043 = vmatprep.subr.bf16.mxu0 0
        %1044 = vmatpush1.bf16.msra.mxu0 0
        %1045 = vmatprep.subr.bf16.mxu0 0
        %1046 = vmatpush1.bf16.msra.mxu0 0
        %1047 = vmatprep.subr.bf16.mxu0 0
        %1048 = vmatpush1.bf16.msra.mxu0 0
        %1049 = vmatprep.subr.bf16.mxu0 0
        %1050 = vmatpush1.bf16.msra.mxu0 0
        %1051 = vmatprep.mubr.bf16.mxu0 0
        %1052 = vmatmul.mubr.bf16.gmra.mrb[0].mxu0 %v1017
        %v1053 = vpop.f32.mrb[0].mxu0
        %v1054 = vadd.f32 0.0, %v1053
        %v1055 = vpop.f32.mrb[0].mxu0
        %v1056 = vpop.f32.mrb[0].mxu0
        %v1057 = vpop.f32.mrb[0].mxu0
        %1058 = vdwg.mxu0
        %v1059 = vadd.f32 %v1009, %v1054
        %v1060 = vxor.u32 %v1059, 2147483648
        %v1061 = vmul.f32 %v1060, 1.442695
        %v1062 = vpow.pop %v1061
        %v1063 = vadd.f32 %v1062, 1.0
        %v1064 = vrcp.pop %v1063
        %v1065 = vmul.f32 1.0, %v1064
        %v1066 = vtanh.pop %v1059
        %v1067 = vmul.f32 %v1065, %v914
        %1069 = vrot.lane.b32.xlu0 %v1066, 64
        %v1070 = vpop.permute.xlu0 %1069
        %v1072 = vmul.f32 %v1065, %v1070
        %1074 = vrot.lane.b32.xlu0 %v1072, 32
        %v1075 = vpop.permute.xlu0 %1074
        %v1077 = vadd.f32 %v1067, %v1075
        %v1078 = vtanh.pop %v1077
        %1080 = vrot.lane.b32.xlu0 %v1078, 64
        %v1081 = vpop.permute.xlu0 %1080
        %v1083 = vmul.f32 %v1065, %v1081
        %1085 = vset.pattern.permute.xlu0 0
        %1086 = vperm.xlu0 %1085, %v1011
        %v1087 = vpop.permute.xlu0 %1086
        %v1089 = vmul.f32 %v1087, %v1083
        %v1090 = vsub.f32 1.0, %v1011
        %1092 = vset.pattern.permute.xlu0 0
        %1093 = vperm.xlu0 %1092, %v1090
        %v1094 = vpop.permute.xlu0 %1093
        %v1096 = vmul.f32 %v1094, %v911
        %v1097 = vadd.f32 %v1089, %v1096
        %v1098 = vmul.f32 %v1087, %v1077
        %v1099 = vmul.f32 %v1094, %v914
        %v1100 = vadd.f32 %v1098, %v1099
        %s1101 = scalar_lea.vmem %s415, 6 [#allocation6]
        %v1102 = vld [vmem:[%s1101] sm:$0x3]
        %s1103 = scalar_lea.vmem %s470, 6
        %v1104 = vld [vmem:[%s1103] sm:$0x3]
        %v1105 = vpack.c.bf16 %v1004, %v1004
        %1107 = vrot.lane.b32.xlu0 %v1105, 32
        %v1108 = vpop.permute.xlu0 %1107
        %v1110 = vsel %vm517, %v1108, 0
        %1112 = vmatprep.subr.bf16.mxu0 0
        %1113 = vmatpush1.bf16.msra.mxu0 %v513
        %1114 = vmatprep.subr.bf16.mxu0 0
        %1115 = vmatpush1.bf16.msra.mxu0 %v514
        %1116 = vmatprep.subr.bf16.mxu0 0
        %1117 = vmatpush1.bf16.msra.mxu0 0
        %1118 = vmatprep.subr.bf16.mxu0 0
        %1119 = vmatpush1.bf16.msra.mxu0 0
        %1120 = vmatprep.subr.bf16.mxu0 0
        %1121 = vmatpush1.bf16.msra.mxu0 0
        %1122 = vmatprep.subr.bf16.mxu0 0
        %1123 = vmatpush1.bf16.msra.mxu0 0
        %1124 = vmatprep.subr.bf16.mxu0 0
        %1125 = vmatpush1.bf16.msra.mxu0 0
        %1126 = vmatprep.subr.bf16.mxu0 0
        %1127 = vmatpush1.bf16.msra.mxu0 0
        %1128 = vmatprep.subr.bf16.mxu0 0
        %1129 = vmatpush1.bf16.msra.mxu0 0
        %1130 = vmatprep.subr.bf16.mxu0 0
        %1131 = vmatpush1.bf16.msra.mxu0 0
        %1132 = vmatprep.subr.bf16.mxu0 0
        %1133 = vmatpush1.bf16.msra.mxu0 0
        %1134 = vmatprep.subr.bf16.mxu0 0
        %1135 = vmatpush1.bf16.msra.mxu0 0
        %1136 = vmatprep.subr.bf16.mxu0 0
        %1137 = vmatpush1.bf16.msra.mxu0 0
        %1138 = vmatprep.subr.bf16.mxu0 0
        %1139 = vmatpush1.bf16.msra.mxu0 0
        %1140 = vmatprep.subr.bf16.mxu0 0
        %1141 = vmatpush1.bf16.msra.mxu0 0
        %1142 = vmatprep.subr.bf16.mxu0 0
        %1143 = vmatpush1.bf16.msra.mxu0 0
        %1144 = vmatprep.mubr.bf16.mxu0 0
        %1145 = vmatmul.mubr.bf16.gmra.mrb[0].mxu0 %v1110
        %v1146 = vpop.f32.mrb[0].mxu0
        %v1147 = vadd.f32 0.0, %v1146
        %v1148 = vpop.f32.mrb[0].mxu0
        %v1149 = vpop.f32.mrb[0].mxu0
        %v1150 = vpop.f32.mrb[0].mxu0
        %1151 = vdwg.mxu0
        %v1152 = vadd.f32 %v1102, %v1147
        %v1153 = vxor.u32 %v1152, 2147483648
        %v1154 = vmul.f32 %v1153, 1.442695
        %v1155 = vpow.pop %v1154
        %v1156 = vadd.f32 %v1155, 1.0
        %v1157 = vrcp.pop %v1156
        %v1158 = vmul.f32 1.0, %v1157
        %v1159 = vtanh.pop %v1152
        %v1160 = vmul.f32 %v1158, %v1007
        %1162 = vrot.lane.b32.xlu0 %v1159, 64
        %v1163 = vpop.permute.xlu0 %1162
        %v1165 = vmul.f32 %v1158, %v1163
        %1167 = vrot.lane.b32.xlu0 %v1165, 32
        %v1168 = vpop.permute.xlu0 %1167
        %v1170 = vadd.f32 %v1160, %v1168
        %v1171 = vtanh.pop %v1170
        %1173 = vrot.lane.b32.xlu0 %v1171, 64
        %v1174 = vpop.permute.xlu0 %1173
        %v1176 = vmul.f32 %v1158, %v1174
        %1178 = vset.pattern.permute.xlu0 0
        %1179 = vperm.xlu0 %1178, %v1104
        %v1180 = vpop.permute.xlu0 %1179
        %v1182 = vmul.f32 %v1180, %v1176
        %v1183 = vsub.f32 1.0, %v1104
        %1185 = vset.pattern.permute.xlu0 0
        %1186 = vperm.xlu0 %1185, %v1183
        %v1187 = vpop.permute.xlu0 %1186
        %v1189 = vmul.f32 %v1187, %v1004
        %v1190 = vadd.f32 %v1182, %v1189
        %v1191 = vmul.f32 %v1180, %v1170
        %v1192 = vmul.f32 %v1187, %v1007
        %v1193 = vadd.f32 %v1191, %v1192
        %v1194 = vld [vmem:[%s422] sm:$0x3]
        %v1195 = vld [vmem:[%s477] sm:$0x3]
        %v1196 = vpack.c.bf16 %v1097, %v1097
        %1198 = vrot.lane.b32.xlu0 %v1196, 32
        %v1199 = vpop.permute.xlu0 %1198
        %v1201 = vsel %vm517, %v1199, 0
        %1203 = vmatprep.subr.bf16.mxu0 0
        %1204 = vmatpush1.bf16.msra.mxu0 %v628
        %1205 = vmatprep.subr.bf16.mxu0 0
        %1206 = vmatpush1.bf16.msra.mxu0 %v629
        %1207 = vmatprep.subr.bf16.mxu0 0
        %1208 = vmatpush1.bf16.msra.mxu0 0
        %1209 = vmatprep.subr.bf16.mxu0 0
        %1210 = vmatpush1.bf16.msra.mxu0 0
        %1211 = vmatprep.subr.bf16.mxu0 0
        %1212 = vmatpush1.bf16.msra.mxu0 0
        %1213 = vmatprep.subr.bf16.mxu0 0
        %1214 = vmatpush1.bf16.msra.mxu0 0
        %1215 = vmatprep.subr.bf16.mxu0 0
        %1216 = vmatpush1.bf16.msra.mxu0 0
        %1217 = vmatprep.subr.bf16.mxu0 0
        %1218 = vmatpush1.bf16.msra.mxu0 0
        %1219 = vmatprep.subr.bf16.mxu0 0
        %1220 = vmatpush1.bf16.msra.mxu0 0
        %1221 = vmatprep.subr.bf16.mxu0 0
        %1222 = vmatpush1.bf16.msra.mxu0 0
        %1223 = vmatprep.subr.bf16.mxu0 0
        %1224 = vmatpush1.bf16.msra.mxu0 0
        %1225 = vmatprep.subr.bf16.mxu0 0
        %1226 = vmatpush1.bf16.msra.mxu0 0
        %1227 = vmatprep.subr.bf16.mxu0 0
        %1228 = vmatpush1.bf16.msra.mxu0 0
        %1229 = vmatprep.subr.bf16.mxu0 0
        %1230 = vmatpush1.bf16.msra.mxu0 0
        %1231 = vmatprep.subr.bf16.mxu0 0
        %1232 = vmatpush1.bf16.msra.mxu0 0
        %1233 = vmatprep.subr.bf16.mxu0 0
        %1234 = vmatpush1.bf16.msra.mxu0 0
        %1235 = vmatprep.mubr.bf16.mxu0 0
        %1236 = vmatmul.mubr.bf16.gmra.mrb[0].mxu0 %v1201
        %v1237 = vpop.f32.mrb[0].mxu0
        %v1238 = vadd.f32 0.0, %v1237
        %v1239 = vpop.f32.mrb[0].mxu0
        %v1240 = vpop.f32.mrb[0].mxu0
        %v1241 = vpop.f32.mrb[0].mxu0
        %1242 = vdwg.mxu0
        %v1243 = vadd.f32 %v1194, %v1238
        %v1244 = vxor.u32 %v1243, 2147483648
        %v1245 = vmul.f32 %v1244, 1.442695
        %v1246 = vpow.pop %v1245
        %v1247 = vadd.f32 %v1246, 1.0
        %v1248 = vrcp.pop %v1247
        %v1249 = vmul.f32 1.0, %v1248
        %v1250 = vtanh.pop %v1243
        %v1251 = vmul.f32 %v1249, %v1100
        %1253 = vrot.lane.b32.xlu0 %v1250, 64
        %v1254 = vpop.permute.xlu0 %1253
        %v1256 = vmul.f32 %v1249, %v1254
        %1258 = vrot.lane.b32.xlu0 %v1256, 32
        %v1259 = vpop.permute.xlu0 %1258
        %v1261 = vadd.f32 %v1251, %v1259
        %v1262 = vtanh.pop %v1261
        %1264 = vrot.lane.b32.xlu0 %v1262, 64
        %v1265 = vpop.permute.xlu0 %1264
        %v1267 = vmul.f32 %v1249, %v1265
        %1269 = vset.pattern.permute.xlu0 0
        %1270 = vperm.xlu0 %1269, %v1195
        %v1271 = vpop.permute.xlu0 %1270
        %v1273 = vmul.f32 %v1271, %v1267
        %v1274 = vsub.f32 1.0, %v1195
        %1276 = vset.pattern.permute.xlu0 0
        %1277 = vperm.xlu0 %1276, %v1274
        %v1278 = vpop.permute.xlu0 %1277
        %v1280 = vmul.f32 %v1278, %v1097
        %v1281 = vadd.f32 %v1273, %v1280
        %v1282 = vmul.f32 %v1271, %v1261
        %v1283 = vmul.f32 %v1278, %v1100
        %v1284 = vadd.f32 %v1282, %v1283
        %1286 = vrot.lane.b32.xlu0 %v1190, 32
        %v1287 = vpop.permute.xlu0 %1286
        %vm1289 = vcmask 254976
        %1290 = vst.msk [vmem:[#allocation2] sm:$0x3] %vm1289, %v1287
        %1292 = vrot.lane.b32.xlu0 %v1193, 96
        %v1293 = vpop.permute.xlu0 %1292
        %1295 = vst.msk [vmem:[#allocation3] sm:$0x3] %vm1289, %v1293
        %1297 = vrot.lane.b32.xlu0 %v1281, 32
        %v1298 = vpop.permute.xlu0 %1297
        %1300 = vst.msk [vmem:[#allocation4] sm:$0x3] %vm1289, %v1298
        %1302 = vrot.lane.b32.xlu0 %v1284, 96
        %v1303 = vpop.permute.xlu0 %1302
        %1305 = vst.msk [vmem:[#allocation5] sm:$0x3] %vm1289, %v1303
        %p1306 = scmp.eq.s32.totalorder %s20, 1
        // Predicated region
        $region139: #{custom_bert2lstm_forward.3} parent=125 // pred_check
          %p1307 = pneg %p1306
        $region140: #{custom_bert2lstm_forward.3} parent=125 // pred_check_branch
          %1309 = sbr.rel (%p1307) target = $region142
        $region141: #{custom_bert2lstm_forward.3} parent=125 // pred_region
          %v1310 = vpack.c.bf16 %v1190, %v1190
          %v1311 = vld [vmem:[%s6] sm:$0xf]
          %v1312 = vld [vmem:[%s6 + $0x4] sm:$0xf]
          %v1313 = vld [vmem:[%s6 + $0x8] sm:$0xf]
          %v1314 = vld [vmem:[%s6 + $0xc] sm:$0xf]
          %v1315 = vpack.c.bf16 %v1281, %v1281
          %v1316 = vld [vmem:[%s6 + $0x10] sm:$0xf]
          %v1317 = vld [vmem:[%s6 + $0x14] sm:$0xf]
          %v1318 = vld [vmem:[%s6 + $0x18] sm:$0xf]
          %v1319 = vld [vmem:[%s6 + $0x1c] sm:$0xf]
          %1321 = vrot.lane.b32.xlu0 %v1315, 32
          %v1322 = vpop.permute.xlu0 %1321
          %v1327 = vunpack.c.l.b16 %v1316
          %v1328 = vunpack.c.l.b16 %v1317
          %v1329 = vunpack.c.l.b16 %v1318
          %v1330 = vunpack.c.l.b16 %v1319
          %v1331 = vpack.c.b16 %v1328, %v1327
          %v1332 = vpack.c.b16 %v1330, %v1329
          %v1336 = vsel %vm517, %v1322, 0
          %1338 = vmatprep.subr.bf16.mxu0 0
          %1339 = vmatpush1.bf16.msra.mxu0 %v1331
          %1340 = vmatprep.subr.bf16.mxu0 0
          %1341 = vmatpush1.bf16.msra.mxu0 %v1332
          %1342 = vmatprep.subr.bf16.mxu0 0
          %1343 = vmatpush1.bf16.msra.mxu0 0
          %1344 = vmatprep.subr.bf16.mxu0 0
          %1345 = vmatpush1.bf16.msra.mxu0 0
          %1346 = vmatprep.subr.bf16.mxu0 0
          %1347 = vmatpush1.bf16.msra.mxu0 0
          %1348 = vmatprep.subr.bf16.mxu0 0
          %1349 = vmatpush1.bf16.msra.mxu0 0
          %1350 = vmatprep.subr.bf16.mxu0 0
          %1351 = vmatpush1.bf16.msra.mxu0 0
          %1352 = vmatprep.subr.bf16.mxu0 0
          %1353 = vmatpush1.bf16.msra.mxu0 0
          %1354 = vmatprep.subr.bf16.mxu0 0
          %1355 = vmatpush1.bf16.msra.mxu0 0
          %1356 = vmatprep.subr.bf16.mxu0 0
          %1357 = vmatpush1.bf16.msra.mxu0 0
          %1358 = vmatprep.subr.bf16.mxu0 0
          %1359 = vmatpush1.bf16.msra.mxu0 0
          %1360 = vmatprep.subr.bf16.mxu0 0
          %1361 = vmatpush1.bf16.msra.mxu0 0
          %1362 = vmatprep.subr.bf16.mxu0 0
          %1363 = vmatpush1.bf16.msra.mxu0 0
          %1364 = vmatprep.subr.bf16.mxu0 0
          %1365 = vmatpush1.bf16.msra.mxu0 0
          %1366 = vmatprep.subr.bf16.mxu0 0
          %1367 = vmatpush1.bf16.msra.mxu0 0
          %1368 = vmatprep.subr.bf16.mxu0 0
          %1369 = vmatpush1.bf16.msra.mxu0 0
          %1370 = vmatprep.mubr.bf16.mxu0 0
          %1371 = vmatmul.mubr.bf16.gmra.mrb[0].mxu0 %v1336
          %v1372 = vpop.f32.mrb[0].mxu0
          %v1373 = vadd.f32 0.0, %v1372
          %v1374 = vpop.f32.mrb[0].mxu0
          %v1375 = vpop.f32.mrb[0].mxu0
          %v1376 = vpop.f32.mrb[0].mxu0
          %1377 = vdwg.mxu0
          %1379 = vrot.lane.b32.xlu0 %v1310, 32
          %v1380 = vpop.permute.xlu0 %1379
          %v1385 = vunpack.c.l.b16 %v1311
          %v1386 = vunpack.c.l.b16 %v1312
          %v1387 = vunpack.c.l.b16 %v1313
          %v1388 = vunpack.c.l.b16 %v1314
          %v1389 = vpack.c.b16 %v1386, %v1385
          %v1390 = vpack.c.b16 %v1388, %v1387
          %v1394 = vsel %vm517, %v1380, 0
          %1396 = vmatprep.subr.bf16.mxu0 0
          %1397 = vmatpush1.bf16.msra.mxu0 %v1389
          %1398 = vmatprep.subr.bf16.mxu0 0
          %1399 = vmatpush1.bf16.msra.mxu0 %v1390
          %1400 = vmatprep.subr.bf16.mxu0 0
          %1401 = vmatpush1.bf16.msra.mxu0 0
          %1402 = vmatprep.subr.bf16.mxu0 0
          %1403 = vmatpush1.bf16.msra.mxu0 0
          %1404 = vmatprep.subr.bf16.mxu0 0
          %1405 = vmatpush1.bf16.msra.mxu0 0
          %1406 = vmatprep.subr.bf16.mxu0 0
          %1407 = vmatpush1.bf16.msra.mxu0 0
          %1408 = vmatprep.subr.bf16.mxu0 0
          %1409 = vmatpush1.bf16.msra.mxu0 0
          %1410 = vmatprep.subr.bf16.mxu0 0
          %1411 = vmatpush1.bf16.msra.mxu0 0
          %1412 = vmatprep.subr.bf16.mxu0 0
          %1413 = vmatpush1.bf16.msra.mxu0 0
          %1414 = vmatprep.subr.bf16.mxu0 0
          %1415 = vmatpush1.bf16.msra.mxu0 0
          %1416 = vmatprep.subr.bf16.mxu0 0
          %1417 = vmatpush1.bf16.msra.mxu0 0
          %1418 = vmatprep.subr.bf16.mxu0 0
          %1419 = vmatpush1.bf16.msra.mxu0 0
          %1420 = vmatprep.subr.bf16.mxu0 0
          %1421 = vmatpush1.bf16.msra.mxu0 0
          %1422 = vmatprep.subr.bf16.mxu0 0
          %1423 = vmatpush1.bf16.msra.mxu0 0
          %1424 = vmatprep.subr.bf16.mxu0 0
          %1425 = vmatpush1.bf16.msra.mxu0 0
          %1426 = vmatprep.subr.bf16.mxu0 0
          %1427 = vmatpush1.bf16.msra.mxu0 0
          %1428 = vmatprep.mubr.bf16.mxu0 0
          %1429 = vmatmul.mubr.bf16.gmra.mrb[0].mxu0 %v1394
          %v1430 = vpop.f32.mrb[0].mxu0
          %v1431 = vadd.f32 %v1373, %v1430
          %v1432 = vpop.f32.mrb[0].mxu0
          %v1433 = vpop.f32.mrb[0].mxu0
          %v1434 = vpop.f32.mrb[0].mxu0
          %1435 = vdwg.mxu0
          %v1436 = vld [vmem:[%s7] sm:$0x1]
          %v1438 = vlaneseq
          %v1439 = vshrl.u32 %v1438, 7
          %v1440 = vsub.s32 0, %v1439
          %v1441 = vrot.slane %v1436, %v1440
          %v1443 = vadd.f32 %v1431, %v1441
          %1444 = vst [vmem:[#allocation8] sm:$0x3] %v1443
        $region142: #{custom_bert2lstm_forward.3} parent=125 // pred_fallthru
          _
        // Predicated region
        $region143: #{custom_bert2lstm_forward.3} parent=125 // pred_check
          %p1445 = pneg %p225
        $region144: #{custom_bert2lstm_forward.3} parent=125 // pred_check_branch
          %1447 = sbr.rel (%p1445) target = $region146
        $region145: #{custom_bert2lstm_forward.3} parent=125 // pred_region
          %s1449 = ssub.s32 32, 32
          %1450 = vsyncadd [#allocation9], %s1449
          %s1452 = sshll.u32 [#allocation8], 4
          %s1453 = int_to_ptr.vmem [resolvable:$true] %s1452
          %1455 = dma.vmem_to_hbm [thread:$0]  %s1453, 32, %s8, [#allocation9]
        $region146: #{custom_bert2lstm_forward.3} parent=125 // pred_fallthru
          _
        // Predicated region
        $region147: #{custom_bert2lstm_forward.3} parent=125 // pred_check
          %p1456 = pneg %p225
        $region148: #{custom_bert2lstm_forward.3} parent=125 // pred_check_branch
          %1458 = sbr.rel (%p1456) target = $region150
        $region149: #{custom_bert2lstm_forward.3} parent=125 // pred_region
          %1459 = dma.done [#allocation9], 32
        $region150: #{custom_bert2lstm_forward.3} parent=125 // pred_fallthru
          _
      $region126: #{custom_bert2lstm_forward.3} parent=5 // pred_fallthru
        _
      %p1460 = scmp.le.s32.totalorder 2, %s15
      // Predicated region
      $region151: #{custom_bert2lstm_forward.3} parent=5 // pred_check
        %p1461 = pneg %p1460
      $region152: #{custom_bert2lstm_forward.3} parent=5 // pred_check_branch
        %1463 = sbr.rel (%p1461) target = $region154
      $region153: #{custom_bert2lstm_forward.3} parent=5 // pred_region
        %s1464 = ssub.s32 %s15, 2
      $region154: #{custom_bert2lstm_forward.3} parent=5 // pred_fallthru
        _
    $region6: #{custom_bert2lstm_forward.3} parent=1 // loop_footer
      %s19 = sadd.s32 1, %s15
    $region7: #{custom_bert2lstm_forward.3} parent=1 // loop_footer_branch
      %14 = sbr.rel target = $region3
    $region8: #{custom_bert2lstm_forward.3} parent=1 // loop_exit
      _
    %1465 = vsyncpa [#allocation9], 1
    %s1466 = scalar_lea.sflag [#allocation9], 1
    %1467 = vsyncpa %s1466, 1

</llo_original>
